<compile_context>
chip_gen: v7x
topology: tpu7x:2x2x1
jax: 0.10.0
libtpu: 0.0.40
codegen_flags: <defaults>
</compile_context>

<pallas_src>
import functools
import math

import jax
import jax.numpy as jnp
import numpy as np
from jax.experimental import pallas as pl
from jax.experimental.pallas import tpu as pltpu


def _self_attn_kernel(x_ref, gamma_ref, beta_ref, gmask_ref,
                      wq_ref, wk_ref, wv_ref, wout_ref, bias_ref,
                      o_ref,
                      q_s, k_s, v_s, m_s, l_s, acc_s, attn_s,
                      *, n_head, head_dim, group_size, eps, block_kv):
    kv = pl.program_id(1)
    last_kv = pl.num_programs(1) - 1

    # ---------------- per-batch prologue: GroupNorm + qkv projection --------
    @pl.when(kv == 0)
    def _init():
        x = x_ref[0].astype(jnp.float32)                       # (S, Cp)
        S = x.shape[0]
        n_elem = jnp.float32(S * group_size)

        # GroupNorm, two-pass (mean, then centred variance). gmask broadcasts
        # each group's sum back onto every channel of the group via the MXU.
        s1 = jnp.sum(x, axis=0, keepdims=True)                 # (1, Cp)
        mean = jnp.dot(s1, gmask_ref[...],
                       preferred_element_type=jnp.float32) / n_elem
        cx = x - mean
        s2 = jnp.sum(cx * cx, axis=0, keepdims=True)
        var = jnp.dot(s2, gmask_ref[...],
                      preferred_element_type=jnp.float32) / n_elem
        inv = jax.lax.rsqrt(var + eps)
        normed = (cx * inv * gamma_ref[...] + beta_ref[...]).astype(jnp.bfloat16)

        # qkv 1x1 conv == channel matmuls (bf16 operands, f32 accumulate).
        # The 1/sqrt(C) softmax scale is pre-folded into wq on the host.
        q_sc = jnp.dot(normed, wq_ref[...], preferred_element_type=jnp.float32)
        k_sc = jnp.dot(normed, wk_ref[...], preferred_element_type=jnp.float32)
        v_sc = jnp.dot(normed, wv_ref[...], preferred_element_type=jnp.float32)

        # Head split into (n_head, S, head_dim) scratch for batched attention.
        for h in range(n_head):
            cols = slice(h * head_dim, (h + 1) * head_dim)
            q_s[h] = q_sc[:, cols].astype(jnp.bfloat16)
            k_s[h] = k_sc[:, cols].astype(jnp.bfloat16)
            v_s[h] = v_sc[:, cols].astype(jnp.bfloat16)

        # online-softmax accumulators
        m_s[...] = jnp.full_like(m_s, -jnp.inf)
        l_s[...] = jnp.zeros_like(l_s)
        acc_s[...] = jnp.zeros_like(acc_s)
        attn_s[...] = jnp.zeros_like(attn_s)     # keeps padded channels at 0

    # -------- online-softmax attention over this kv block (heads batched) ---
    start = pl.multiple_of(kv * block_kv, block_kv)
    k_blk = k_s[:, pl.ds(start, block_kv), :]                  # (nh, bkv, d)
    v_blk = v_s[:, pl.ds(start, block_kv), :]
    s = jnp.einsum('hqd,hkd->hqk', q_s[...], k_blk,
                   preferred_element_type=jnp.float32)         # (nh, S, bkv)
    m_prev = m_s[...]
    m_new = jnp.maximum(m_prev, jnp.max(s, axis=-1, keepdims=True))
    alpha = jnp.exp(m_prev - m_new)
    p = jnp.exp(s - m_new)
    l_s[...] = alpha * l_s[...] + jnp.sum(p, axis=-1, keepdims=True)
    acc_s[...] = alpha * acc_s[...] + jnp.einsum(
        'hqk,hkd->hqd', p.astype(jnp.bfloat16), v_blk,
        preferred_element_type=jnp.float32)
    m_s[...] = m_new

    # ---------------- epilogue: out projection + bias + residual ------------
    @pl.when(kv == last_kv)
    def _finalize():
        inv_l = pl.reciprocal(l_s[...], approx=True)           # (nh, S, 1)
        for h in range(n_head):
            cols = slice(h * head_dim, (h + 1) * head_dim)
            attn_s[:, cols] = (acc_s[h] * inv_l[h]).astype(jnp.bfloat16)
        x = x_ref[0].astype(jnp.float32)
        y = jnp.dot(attn_s[...], wout_ref[...],
                    preferred_element_type=jnp.float32)
        y = y + bias_ref[...] + x
        o_ref[0] = y.astype(o_ref.dtype)


def self_attention_pallas(x_nchw, gamma, beta, w_qkv, w_out, b_out,
                          *, n_head, num_groups, eps=1e-5, max_kv_block=512):
    B, C, H, W = x_nchw.shape
    S = H * W
    head_dim = C // n_head
    group_size = C // num_groups
    Cp = ((C + 127) // 128) * 128          # lane-dense channel padding
    pad = Cp - C

    block_kv = S if S <= max_kv_block else max_kv_block
    assert S % block_kv == 0, "H*W must be a multiple of the kv block size"
    n_kv = S // block_kv

    # NCHW -> (B, S, C) token layout, channels zero-padded to lane width.
    x_sc = jnp.transpose(x_nchw.reshape(B, C, S), (0, 2, 1))
    x_sc = jnp.pad(x_sc, ((0, 0), (0, 0), (0, pad)))

    # Split the qkv conv weight (3C, C) into per-role (C, C) slabs laid out so
    # that column h*head_dim + r of q/k/v belongs to head h, dim r (matches the
    # PyTorch view/chunk ordering). Fold 1/sqrt(C) into the q weights.
    w3 = w_qkv.reshape(n_head, 3, head_dim, C)
    scale = 1.0 / math.sqrt(C)

    def prep_w(w_oc, s=1.0):               # (C_out, C_in) -> padded (Cp, Cp) bf16
        wt = jnp.transpose(w_oc) * s        # (C_in, C_out)
        return jnp.pad(wt, ((0, pad), (0, pad))).astype(jnp.bfloat16)

    wq_t = prep_w(w3[:, 0].reshape(C, C), scale)
    wk_t = prep_w(w3[:, 1].reshape(C, C))
    wv_t = prep_w(w3[:, 2].reshape(C, C))
    wout_t = prep_w(w_out)

    gamma2 = jnp.pad(gamma, (0, pad)).reshape(1, Cp).astype(jnp.float32)
    beta2 = jnp.pad(beta, (0, pad)).reshape(1, Cp).astype(jnp.float32)
    bias2 = jnp.pad(b_out, (0, pad)).reshape(1, Cp).astype(jnp.float32)

    # Host-built group-membership matrix; padded channels go to a dummy group
    # whose sums are zero, so they normalise to exactly zero.
    gid = np.concatenate([np.arange(C) // group_size,
                          np.full(pad, num_groups, dtype=np.int64)])
    gmask = jnp.asarray((gid[:, None] == gid[None, :]).astype(np.float32))

    kernel = functools.partial(
        _self_attn_kernel, n_head=n_head, head_dim=head_dim,
        group_size=group_size, eps=eps, block_kv=block_kv)

    out_sc = pl.pallas_call(
        kernel,
        out_shape=jax.ShapeDtypeStruct((B, S, Cp), x_nchw.dtype),
        grid_spec=pltpu.PrefetchScalarGridSpec(
            num_scalar_prefetch=0,
            grid=(B, n_kv),
            in_specs=[
                pl.BlockSpec((1, S, Cp), lambda b, k: (b, 0, 0)),   # x
                pl.BlockSpec((1, Cp), lambda b, k: (0, 0)),         # gamma
                pl.BlockSpec((1, Cp), lambda b, k: (0, 0)),         # beta
                pl.BlockSpec((Cp, Cp), lambda b, k: (0, 0)),        # gmask
                pl.BlockSpec((Cp, Cp), lambda b, k: (0, 0)),        # wq
                pl.BlockSpec((Cp, Cp), lambda b, k: (0, 0)),        # wk
                pl.BlockSpec((Cp, Cp), lambda b, k: (0, 0)),        # wv
                pl.BlockSpec((Cp, Cp), lambda b, k: (0, 0)),        # wout
                pl.BlockSpec((1, Cp), lambda b, k: (0, 0)),         # bias
            ],
            out_specs=pl.BlockSpec((1, S, Cp), lambda b, k: (b, 0, 0)),
            scratch_shapes=[
                pltpu.VMEM((n_head, S, head_dim), jnp.bfloat16),    # q
                pltpu.VMEM((n_head, S, head_dim), jnp.bfloat16),    # k
                pltpu.VMEM((n_head, S, head_dim), jnp.bfloat16),    # v
                pltpu.VMEM((n_head, S, 1), jnp.float32),            # m (running max)
                pltpu.VMEM((n_head, S, 1), jnp.float32),            # l (running sum)
                pltpu.VMEM((n_head, S, head_dim), jnp.float32),     # acc
                pltpu.VMEM((S, Cp), jnp.bfloat16),                  # attn-out slab
            ],
        ),
        compiler_params=pltpu.CompilerParams(
            dimension_semantics=("parallel", "arbitrary"),
            vmem_limit_bytes=64 * 1024 * 1024,
        ),
    )(x_sc, gamma2, beta2, gmask, wq_t, wk_t, wv_t, wout_t, bias2)

    # strip channel padding and go back to NCHW
    out = out_sc[:, :, :C]
    return jnp.transpose(out, (0, 2, 1)).reshape(B, C, H, W)


def self_attention_reference(x, gamma, beta, w_qkv, w_out, b_out,
                             *, n_head, num_groups, eps=1e-5):
    """Plain-JAX (f32) mirror of the PyTorch forward (NCHW)."""
    B, C, H, W = x.shape
    cg = C // num_groups
    xg = x.reshape(B, num_groups, cg, H, W)
    mean = xg.mean(axis=(2, 3, 4), keepdims=True)
    var = xg.var(axis=(2, 3, 4), keepdims=True)
    normed = ((xg - mean) / jnp.sqrt(var + eps)).reshape(B, C, H, W)
    normed = normed * gamma[None, :, None, None] + beta[None, :, None, None]
    qkv = jnp.einsum('oc,bchw->bohw', w_qkv, normed)
    qkv = qkv.reshape(B, n_head, (C // n_head) * 3, H, W)
    q, k, v = jnp.split(qkv, 3, axis=2)
    attn = jnp.einsum('bnchw,bncyx->bnhwyx', q, k) / math.sqrt(C)
    attn = jax.nn.softmax(attn.reshape(B, n_head, H, W, H * W), axis=-1)
    attn = attn.reshape(B, n_head, H, W, H, W)
    out = jnp.einsum('bnhwyx,bncyx->bnchw', attn, v).reshape(B, C, H, W)
    out = jnp.einsum('oc,bchw->bohw', w_out, out) + b_out[None, :, None, None]
    return out + x


if __name__ == "__main__":
    B, C, H, W = 2, 32, 8, 8
    n_head, num_groups = 2, 8

    key = jax.random.PRNGKey(0)
    k_x, k_qkv, k_out, k_b = jax.random.split(key, 4)

    x = jax.random.normal(k_x, (B, C, H, W), dtype=jnp.float32)
    gamma = jnp.ones((C,), jnp.float32)
    beta = jnp.zeros((C,), jnp.float32)
    w_qkv = jax.random.normal(k_qkv, (3 * C, C), jnp.float32) * (1.0 / math.sqrt(C))
    w_out = jax.random.normal(k_out, (C, C), jnp.float32) * (1.0 / math.sqrt(C))
    b_out = jax.random.normal(k_b, (C,), jnp.float32) * 0.1

    out = self_attention_pallas(x, gamma, beta, w_qkv, w_out, b_out,
                                n_head=n_head, num_groups=num_groups)
    out = jax.block_until_ready(out)

    ref = self_attention_reference(x, gamma, beta, w_qkv, w_out, b_out,
                                   n_head=n_head, num_groups=num_groups)
    # bf16 MXU operands vs f32 reference -> a few e-3 absolute error expected.
    np.testing.assert_allclose(np.asarray(out), np.asarray(ref),
                               rtol=2e-2, atol=2e-2)
    print("KERNEL_OK")
</pallas_src>

<mosaic_0001>
module attributes {stable_mosaic.version = 11 : i64} {
  func.func @_self_attn_kernel(%arg0: i32, %arg1: i32, %arg2: memref<1x64x128xf32, #tpu.memory_space<vmem>>, %arg3: memref<1x128xf32, #tpu.memory_space<vmem>>, %arg4: memref<1x128xf32, #tpu.memory_space<vmem>>, %arg5: memref<128x128xf32, #tpu.memory_space<vmem>>, %arg6: memref<128x128xbf16, #tpu.memory_space<vmem>>, %arg7: memref<128x128xbf16, #tpu.memory_space<vmem>>, %arg8: memref<128x128xbf16, #tpu.memory_space<vmem>>, %arg9: memref<128x128xbf16, #tpu.memory_space<vmem>>, %arg10: memref<1x128xf32, #tpu.memory_space<vmem>>, %arg11: memref<1x64x128xf32, #tpu.memory_space<vmem>>, %arg12: memref<2x64x16xbf16, #tpu.memory_space<vmem>>, %arg13: memref<2x64x16xbf16, #tpu.memory_space<vmem>>, %arg14: memref<2x64x16xbf16, #tpu.memory_space<vmem>>, %arg15: memref<2x64x1xf32, #tpu.memory_space<vmem>>, %arg16: memref<2x64x1xf32, #tpu.memory_space<vmem>>, %arg17: memref<2x64x16xf32, #tpu.memory_space<vmem>>, %arg18: memref<64x128xbf16, #tpu.memory_space<vmem>>) attributes {dimension_semantics = [#tpu.dimension_semantics<parallel>, #tpu.dimension_semantics<arbitrary>], iteration_bounds = array<i64: 2, 1>, scalar_prefetch = 0 : i64, scratch_operands = 7 : i64, tpu.core_type = #tpu.core_type<tc>, window_params = [{transform_indices = @transform_0, window_bounds = array<i64: 1, 64, 128>}, {pipeline_mode = #tpu.pipeline_mode<synchronous>, transform_indices = @transform_1, window_bounds = array<i64: 1, 128>}, {pipeline_mode = #tpu.pipeline_mode<synchronous>, transform_indices = @transform_2, window_bounds = array<i64: 1, 128>}, {pipeline_mode = #tpu.pipeline_mode<synchronous>, transform_indices = @transform_3, window_bounds = array<i64: 128, 128>}, {pipeline_mode = #tpu.pipeline_mode<synchronous>, transform_indices = @transform_4, window_bounds = array<i64: 128, 128>}, {pipeline_mode = #tpu.pipeline_mode<synchronous>, transform_indices = @transform_5, window_bounds = array<i64: 128, 128>}, {pipeline_mode = #tpu.pipeline_mode<synchronous>, transform_indices = @transform_6, window_bounds = array<i64: 128, 128>}, {pipeline_mode = #tpu.pipeline_mode<synchronous>, transform_indices = @transform_7, window_bounds = array<i64: 128, 128>}, {pipeline_mode = #tpu.pipeline_mode<synchronous>, transform_indices = @transform_8, window_bounds = array<i64: 1, 128>}, {transform_indices = @transform_9, window_bounds = array<i64: 1, 64, 128>}]} {
    %c0_i32 = arith.constant 0 : i32
    %0 = arith.cmpi eq, %arg1, %c0_i32 : i32
    %1 = arith.extui %0 : i1 to i32
    %c0_i32_0 = arith.constant 0 : i32
    %2 = arith.cmpi ne, %1, %c0_i32_0 : i32
    scf.if %2 {
      %c0_30 = arith.constant 0 : index
      %c0_31 = arith.constant 0 : index
      %c0_32 = arith.constant 0 : index
      %37 = vector.load %arg2[%c0_30, %c0_31, %c0_32] : memref<1x64x128xf32, #tpu.memory_space<vmem>>, vector<1x64x128xf32>
      %38 = vector.shape_cast %37 : vector<1x64x128xf32> to vector<64x128xf32>
      %cst_33 = arith.constant dense<0.000000e+00> : vector<128xf32>
      %39 = vector.multi_reduction <add>, %38, %cst_33 [0] : vector<64x128xf32> to vector<128xf32>
      %40 = vector.shape_cast %39 : vector<128xf32> to vector<1x128xf32>
      %c0_34 = arith.constant 0 : index
      %c0_35 = arith.constant 0 : index
      %41 = vector.load %arg5[%c0_34, %c0_35] : memref<128x128xf32, #tpu.memory_space<vmem>>, vector<128x128xf32>
      %cst_36 = arith.constant dense<0.000000e+00> : vector<1x128xf32>
      %42 = tpu.matmul %40, %41, %cst_36 {dimension_numbers = #tpu.dot_dimension_numbers<[1], [0], [0], [1], [0, 0, 1, 1], [], []>} : vector<1x128xf32>, vector<128x128xf32>, vector<1x128xf32> -> vector<1x128xf32>
      %cst_37 = arith.constant 2.560000e+02 : f32
      %43 = vector.broadcast %cst_37 : f32 to vector<1x128xf32>
      %44 = arith.divf %42, %43 : vector<1x128xf32>
      %45 = vector.broadcast %44 : vector<1x128xf32> to vector<64x128xf32>
      %46 = arith.subf %38, %45 : vector<64x128xf32>
      %47 = arith.mulf %46, %46 : vector<64x128xf32>
      %cst_38 = arith.constant dense<0.000000e+00> : vector<128xf32>
      %48 = vector.multi_reduction <add>, %47, %cst_38 [0] : vector<64x128xf32> to vector<128xf32>
      %49 = vector.shape_cast %48 : vector<128xf32> to vector<1x128xf32>
      %c0_39 = arith.constant 0 : index
      %c0_40 = arith.constant 0 : index
      %50 = vector.load %arg5[%c0_39, %c0_40] : memref<128x128xf32, #tpu.memory_space<vmem>>, vector<128x128xf32>
      %cst_41 = arith.constant dense<0.000000e+00> : vector<1x128xf32>
      %51 = tpu.matmul %49, %50, %cst_41 {dimension_numbers = #tpu.dot_dimension_numbers<[1], [0], [0], [1], [0, 0, 1, 1], [], []>} : vector<1x128xf32>, vector<128x128xf32>, vector<1x128xf32> -> vector<1x128xf32>
      %cst_42 = arith.constant 2.560000e+02 : f32
      %52 = vector.broadcast %cst_42 : f32 to vector<1x128xf32>
      %53 = arith.divf %51, %52 : vector<1x128xf32>
      %cst_43 = arith.constant 9.99999974E-6 : f32
      %54 = vector.broadcast %cst_43 : f32 to vector<1x128xf32>
      %55 = arith.addf %53, %54 : vector<1x128xf32>
      %56 = math.rsqrt %55 : vector<1x128xf32>
      %57 = vector.broadcast %56 : vector<1x128xf32> to vector<64x128xf32>
      %58 = arith.mulf %46, %57 : vector<64x128xf32>
      %c0_44 = arith.constant 0 : index
      %c0_45 = arith.constant 0 : index
      %59 = vector.load %arg3[%c0_44, %c0_45] : memref<1x128xf32, #tpu.memory_space<vmem>>, vector<1x128xf32>
      %60 = vector.broadcast %59 : vector<1x128xf32> to vector<64x128xf32>
      %61 = arith.mulf %58, %60 : vector<64x128xf32>
      %c0_46 = arith.constant 0 : index
      %c0_47 = arith.constant 0 : index
      %62 = vector.load %arg4[%c0_46, %c0_47] : memref<1x128xf32, #tpu.memory_space<vmem>>, vector<1x128xf32>
      %63 = vector.broadcast %62 : vector<1x128xf32> to vector<64x128xf32>
      %64 = arith.addf %61, %63 : vector<64x128xf32>
      %65 = arith.truncf %64 : vector<64x128xf32> to vector<64x128xbf16>
      %c0_48 = arith.constant 0 : index
      %c0_49 = arith.constant 0 : index
      %66 = vector.load %arg6[%c0_48, %c0_49] : memref<128x128xbf16, #tpu.memory_space<vmem>>, vector<128x128xbf16>
      %cst_50 = arith.constant dense<0.000000e+00> : vector<64x128xf32>
      %67 = tpu.matmul %65, %66, %cst_50 {dimension_numbers = #tpu.dot_dimension_numbers<[1], [0], [0], [1], [0, 0, 1, 1], [], []>} : vector<64x128xbf16>, vector<128x128xbf16>, vector<64x128xf32> -> vector<64x128xf32>
      %c0_51 = arith.constant 0 : index
      %c0_52 = arith.constant 0 : index
      %68 = vector.load %arg7[%c0_51, %c0_52] : memref<128x128xbf16, #tpu.memory_space<vmem>>, vector<128x128xbf16>
      %cst_53 = arith.constant dense<0.000000e+00> : vector<64x128xf32>
      %69 = tpu.matmul %65, %68, %cst_53 {dimension_numbers = #tpu.dot_dimension_numbers<[1], [0], [0], [1], [0, 0, 1, 1], [], []>} : vector<64x128xbf16>, vector<128x128xbf16>, vector<64x128xf32> -> vector<64x128xf32>
      %c0_54 = arith.constant 0 : index
      %c0_55 = arith.constant 0 : index
      %70 = vector.load %arg8[%c0_54, %c0_55] : memref<128x128xbf16, #tpu.memory_space<vmem>>, vector<128x128xbf16>
      %cst_56 = arith.constant dense<0.000000e+00> : vector<64x128xf32>
      %71 = tpu.matmul %65, %70, %cst_56 {dimension_numbers = #tpu.dot_dimension_numbers<[1], [0], [0], [1], [0, 0, 1, 1], [], []>} : vector<64x128xbf16>, vector<128x128xbf16>, vector<64x128xf32> -> vector<64x128xf32>
      %72 = vector.extract_strided_slice %67 {offsets = [0, 0], sizes = [64, 16], strides = [1, 1]} : vector<64x128xf32> to vector<64x16xf32>
      %73 = arith.truncf %72 : vector<64x16xf32> to vector<64x16xbf16>
      %c0_57 = arith.constant 0 : index
      %c0_58 = arith.constant 0 : index
      %c0_59 = arith.constant 0 : index
      %74 = vector.load %arg12[%c0_57, %c0_58, %c0_59] : memref<2x64x16xbf16, #tpu.memory_space<vmem>>, vector<1x64x16xbf16>
      %75 = vector.shape_cast %74 : vector<1x64x16xbf16> to vector<64x16xbf16>
      %76 = vector.shape_cast %73 : vector<64x16xbf16> to vector<1x64x16xbf16>
      tpu.vector_store %arg12[%c0_57, %c0_58, %c0_59], %76 {strides = array<i32>} : memref<2x64x16xbf16, #tpu.memory_space<vmem>>, vector<1x64x16xbf16>,
      %77 = vector.extract_strided_slice %69 {offsets = [0, 0], sizes = [64, 16], strides = [1, 1]} : vector<64x128xf32> to vector<64x16xf32>
      %78 = arith.truncf %77 : vector<64x16xf32> to vector<64x16xbf16>
      %c0_60 = arith.constant 0 : index
      %c0_61 = arith.constant 0 : index
      %c0_62 = arith.constant 0 : index
      %79 = vector.load %arg13[%c0_60, %c0_61, %c0_62] : memref<2x64x16xbf16, #tpu.memory_space<vmem>>, vector<1x64x16xbf16>
      %80 = vector.shape_cast %79 : vector<1x64x16xbf16> to vector<64x16xbf16>
      %81 = vector.shape_cast %78 : vector<64x16xbf16> to vector<1x64x16xbf16>
      tpu.vector_store %arg13[%c0_60, %c0_61, %c0_62], %81 {strides = array<i32>} : memref<2x64x16xbf16, #tpu.memory_space<vmem>>, vector<1x64x16xbf16>,
      %82 = vector.extract_strided_slice %71 {offsets = [0, 0], sizes = [64, 16], strides = [1, 1]} : vector<64x128xf32> to vector<64x16xf32>
      %83 = arith.truncf %82 : vector<64x16xf32> to vector<64x16xbf16>
      %c0_63 = arith.constant 0 : index
      %c0_64 = arith.constant 0 : index
      %c0_65 = arith.constant 0 : index
      %84 = vector.load %arg14[%c0_63, %c0_64, %c0_65] : memref<2x64x16xbf16, #tpu.memory_space<vmem>>, vector<1x64x16xbf16>
      %85 = vector.shape_cast %84 : vector<1x64x16xbf16> to vector<64x16xbf16>
      %86 = vector.shape_cast %83 : vector<64x16xbf16> to vector<1x64x16xbf16>
      tpu.vector_store %arg14[%c0_63, %c0_64, %c0_65], %86 {strides = array<i32>} : memref<2x64x16xbf16, #tpu.memory_space<vmem>>, vector<1x64x16xbf16>,
      %87 = vector.extract_strided_slice %67 {offsets = [0, 16], sizes = [64, 16], strides = [1, 1]} : vector<64x128xf32> to vector<64x16xf32>
      %88 = arith.truncf %87 : vector<64x16xf32> to vector<64x16xbf16>
      %c1 = arith.constant 1 : index
      %c0_66 = arith.constant 0 : index
      %c0_67 = arith.constant 0 : index
      %89 = vector.load %arg12[%c1, %c0_66, %c0_67] : memref<2x64x16xbf16, #tpu.memory_space<vmem>>, vector<1x64x16xbf16>
      %90 = vector.shape_cast %89 : vector<1x64x16xbf16> to vector<64x16xbf16>
      %91 = vector.shape_cast %88 : vector<64x16xbf16> to vector<1x64x16xbf16>
      tpu.vector_store %arg12[%c1, %c0_66, %c0_67], %91 {strides = array<i32>} : memref<2x64x16xbf16, #tpu.memory_space<vmem>>, vector<1x64x16xbf16>,
      %92 = vector.extract_strided_slice %69 {offsets = [0, 16], sizes = [64, 16], strides = [1, 1]} : vector<64x128xf32> to vector<64x16xf32>
      %93 = arith.truncf %92 : vector<64x16xf32> to vector<64x16xbf16>
      %c1_68 = arith.constant 1 : index
      %c0_69 = arith.constant 0 : index
      %c0_70 = arith.constant 0 : index
      %94 = vector.load %arg13[%c1_68, %c0_69, %c0_70] : memref<2x64x16xbf16, #tpu.memory_space<vmem>>, vector<1x64x16xbf16>
      %95 = vector.shape_cast %94 : vector<1x64x16xbf16> to vector<64x16xbf16>
      %96 = vector.shape_cast %93 : vector<64x16xbf16> to vector<1x64x16xbf16>
      tpu.vector_store %arg13[%c1_68, %c0_69, %c0_70], %96 {strides = array<i32>} : memref<2x64x16xbf16, #tpu.memory_space<vmem>>, vector<1x64x16xbf16>,
      %97 = vector.extract_strided_slice %71 {offsets = [0, 16], sizes = [64, 16], strides = [1, 1]} : vector<64x128xf32> to vector<64x16xf32>
      %98 = arith.truncf %97 : vector<64x16xf32> to vector<64x16xbf16>
      %c1_71 = arith.constant 1 : index
      %c0_72 = arith.constant 0 : index
      %c0_73 = arith.constant 0 : index
      %99 = vector.load %arg14[%c1_71, %c0_72, %c0_73] : memref<2x64x16xbf16, #tpu.memory_space<vmem>>, vector<1x64x16xbf16>
      %100 = vector.shape_cast %99 : vector<1x64x16xbf16> to vector<64x16xbf16>
      %101 = vector.shape_cast %98 : vector<64x16xbf16> to vector<1x64x16xbf16>
      tpu.vector_store %arg14[%c1_71, %c0_72, %c0_73], %101 {strides = array<i32>} : memref<2x64x16xbf16, #tpu.memory_space<vmem>>, vector<1x64x16xbf16>,
      %cst_74 = arith.constant 0xFF800000 : f32
      %102 = vector.broadcast %cst_74 : f32 to vector<2x64x1xf32>
      %c0_75 = arith.constant 0 : index
      %c0_76 = arith.constant 0 : index
      %c0_77 = arith.constant 0 : index
      %103 = vector.load %arg15[%c0_75, %c0_76, %c0_77] : memref<2x64x1xf32, #tpu.memory_space<vmem>>, vector<2x64x1xf32>
      tpu.vector_store %arg15[%c0_75, %c0_76, %c0_77], %102 {strides = array<i32>} : memref<2x64x1xf32, #tpu.memory_space<vmem>>, vector<2x64x1xf32>,
      %cst_78 = arith.constant 0.000000e+00 : f32
      %104 = vector.broadcast %cst_78 : f32 to vector<2x64x1xf32>
      %c0_79 = arith.constant 0 : index
      %c0_80 = arith.constant 0 : index
      %c0_81 = arith.constant 0 : index
      %105 = vector.load %arg16[%c0_79, %c0_80, %c0_81] : memref<2x64x1xf32, #tpu.memory_space<vmem>>, vector<2x64x1xf32>
      tpu.vector_store %arg16[%c0_79, %c0_80, %c0_81], %104 {strides = array<i32>} : memref<2x64x1xf32, #tpu.memory_space<vmem>>, vector<2x64x1xf32>,
      %cst_82 = arith.constant 0.000000e+00 : f32
      %106 = vector.broadcast %cst_82 : f32 to vector<2x64x16xf32>
      %c0_83 = arith.constant 0 : index
      %c0_84 = arith.constant 0 : index
      %c0_85 = arith.constant 0 : index
      %107 = vector.load %arg17[%c0_83, %c0_84, %c0_85] : memref<2x64x16xf32, #tpu.memory_space<vmem>>, vector<2x64x16xf32>
      tpu.vector_store %arg17[%c0_83, %c0_84, %c0_85], %106 {strides = array<i32>} : memref<2x64x16xf32, #tpu.memory_space<vmem>>, vector<2x64x16xf32>,
      %cst_86 = arith.constant 0.000000e+00 : bf16
      %108 = vector.broadcast %cst_86 : bf16 to vector<64x128xbf16>
      %c0_87 = arith.constant 0 : index
      %c0_88 = arith.constant 0 : index
      %109 = vector.load %arg18[%c0_87, %c0_88] : memref<64x128xbf16, #tpu.memory_space<vmem>>, vector<64x128xbf16>
      tpu.vector_store %arg18[%c0_87, %c0_88], %108 {strides = array<i32>} : memref<64x128xbf16, #tpu.memory_space<vmem>>, vector<64x128xbf16>,
    } else {
    }
    %c64_i32 = arith.constant 64 : i32
    %3 = arith.muli %arg1, %c64_i32 : i32
    %4 = tpu.assume_multiple %3, 64 : i32
    %c0 = arith.constant 0 : index
    %5 = arith.index_cast %4 : i32 to index
    %c0_1 = arith.constant 0 : index
    %6 = vector.load %arg13[%c0, %5, %c0_1] : memref<2x64x16xbf16, #tpu.memory_space<vmem>>, vector<2x64x16xbf16>
    %c0_2 = arith.constant 0 : index
    %7 = arith.index_cast %4 : i32 to index
    %c0_3 = arith.constant 0 : index
    %8 = vector.load %arg14[%c0_2, %7, %c0_3] : memref<2x64x16xbf16, #tpu.memory_space<vmem>>, vector<2x64x16xbf16>
    %c0_4 = arith.constant 0 : index
    %c0_5 = arith.constant 0 : index
    %c0_6 = arith.constant 0 : index
    %9 = vector.load %arg12[%c0_4, %c0_5, %c0_6] : memref<2x64x16xbf16, #tpu.memory_space<vmem>>, vector<2x64x16xbf16>
    "tpu.trace_start"() <{level = 10 : i32, message = "hqd,hkd->hqk"}> : () -> ()
    %cst = arith.constant dense<0.000000e+00> : vector<2x64x64xf32>
    %10 = tpu.matmul %9, %6, %cst {dimension_numbers = #tpu.dot_dimension_numbers<[2], [2], [1], [1], [0, 0, 0, 1, 1, 1], [0], [0]>} : vector<2x64x16xbf16>, vector<2x64x16xbf16>, vector<2x64x64xf32> -> vector<2x64x64xf32>
    "tpu.trace_stop"() : () -> ()
    %c0_7 = arith.constant 0 : index
    %c0_8 = arith.constant 0 : index
    %c0_9 = arith.constant 0 : index
    %11 = vector.load %arg15[%c0_7, %c0_8, %c0_9] : memref<2x64x1xf32, #tpu.memory_space<vmem>>, vector<2x64x1xf32>
    %cst_10 = arith.constant dense<0xFF800000> : vector<2x64xf32>
    %12 = vector.multi_reduction <maximumf>, %10, %cst_10 [2] : vector<2x64x64xf32> to vector<2x64xf32>
    %13 = vector.shape_cast %12 : vector<2x64xf32> to vector<2x64x1xf32>
    %14 = arith.maximumf %11, %13 : vector<2x64x1xf32>
    %15 = arith.subf %11, %14 : vector<2x64x1xf32>
    %16 = math.exp %15 : vector<2x64x1xf32>
    %17 = vector.broadcast %14 : vector<2x64x1xf32> to vector<2x64x64xf32>
    %18 = arith.subf %10, %17 : vector<2x64x64xf32>
    %19 = math.exp %18 : vector<2x64x64xf32>
    %c0_11 = arith.constant 0 : index
    %c0_12 = arith.constant 0 : index
    %c0_13 = arith.constant 0 : index
    %20 = vector.load %arg16[%c0_11, %c0_12, %c0_13] : memref<2x64x1xf32, #tpu.memory_space<vmem>>, vector<2x64x1xf32>
    %21 = arith.mulf %16, %20 : vector<2x64x1xf32>
    %cst_14 = arith.constant dense<0.000000e+00> : vector<2x64xf32>
    %22 = vector.multi_reduction <add>, %19, %cst_14 [2] : vector<2x64x64xf32> to vector<2x64xf32>
    %23 = vector.shape_cast %22 : vector<2x64xf32> to vector<2x64x1xf32>
    %24 = arith.addf %21, %23 : vector<2x64x1xf32>
    %c0_15 = arith.constant 0 : index
    %c0_16 = arith.constant 0 : index
    %c0_17 = arith.constant 0 : index
    %25 = vector.load %arg16[%c0_15, %c0_16, %c0_17] : memref<2x64x1xf32, #tpu.memory_space<vmem>>, vector<2x64x1xf32>
    tpu.vector_store %arg16[%c0_15, %c0_16, %c0_17], %24 {strides = array<i32>} : memref<2x64x1xf32, #tpu.memory_space<vmem>>, vector<2x64x1xf32>,
    %c0_18 = arith.constant 0 : index
    %c0_19 = arith.constant 0 : index
    %c0_20 = arith.constant 0 : index
    %26 = vector.load %arg17[%c0_18, %c0_19, %c0_20] : memref<2x64x16xf32, #tpu.memory_space<vmem>>, vector<2x64x16xf32>
    %27 = vector.broadcast %16 : vector<2x64x1xf32> to vector<2x64x16xf32>
    %28 = arith.mulf %27, %26 : vector<2x64x16xf32>
    %29 = arith.truncf %19 : vector<2x64x64xf32> to vector<2x64x64xbf16>
    "tpu.trace_start"() <{level = 10 : i32, message = "hqk,hkd->hqd"}> : () -> ()
    %cst_21 = arith.constant dense<0.000000e+00> : vector<2x64x16xf32>
    %30 = tpu.matmul %29, %8, %cst_21 {dimension_numbers = #tpu.dot_dimension_numbers<[2], [1], [1], [2], [0, 0, 0, 1, 1, 2], [0], [0]>} : vector<2x64x64xbf16>, vector<2x64x16xbf16>, vector<2x64x16xf32> -> vector<2x64x16xf32>
    "tpu.trace_stop"() : () -> ()
    %31 = arith.addf %28, %30 : vector<2x64x16xf32>
    %c0_22 = arith.constant 0 : index
    %c0_23 = arith.constant 0 : index
    %c0_24 = arith.constant 0 : index
    %32 = vector.load %arg17[%c0_22, %c0_23, %c0_24] : memref<2x64x16xf32, #tpu.memory_space<vmem>>, vector<2x64x16xf32>
    tpu.vector_store %arg17[%c0_22, %c0_23, %c0_24], %31 {strides = array<i32>} : memref<2x64x16xf32, #tpu.memory_space<vmem>>, vector<2x64x16xf32>,
    %c0_25 = arith.constant 0 : index
    %c0_26 = arith.constant 0 : index
    %c0_27 = arith.constant 0 : index
    %33 = vector.load %arg15[%c0_25, %c0_26, %c0_27] : memref<2x64x1xf32, #tpu.memory_space<vmem>>, vector<2x64x1xf32>
    tpu.vector_store %arg15[%c0_25, %c0_26, %c0_27], %14 {strides = array<i32>} : memref<2x64x1xf32, #tpu.memory_space<vmem>>, vector<2x64x1xf32>,
    %c0_i32_28 = arith.constant 0 : i32
    %34 = arith.cmpi eq, %arg1, %c0_i32_28 : i32
    %35 = arith.extui %34 : i1 to i32
    %c0_i32_29 = arith.constant 0 : i32
    %36 = arith.cmpi ne, %35, %c0_i32_29 : i32
    scf.if %36 {
      %c0_30 = arith.constant 0 : index
      %c0_31 = arith.constant 0 : index
      %c0_32 = arith.constant 0 : index
      %37 = vector.load %arg16[%c0_30, %c0_31, %c0_32] : memref<2x64x1xf32, #tpu.memory_space<vmem>>, vector<2x64x1xf32>
      %38 = tpu.reciprocal %37 {approx = true} : vector<2x64x1xf32> -> vector<2x64x1xf32>
      %c0_33 = arith.constant 0 : index
      %c0_34 = arith.constant 0 : index
      %c0_35 = arith.constant 0 : index
      %39 = vector.load %arg17[%c0_33, %c0_34, %c0_35] : memref<2x64x16xf32, #tpu.memory_space<vmem>>, vector<1x64x16xf32>
      %40 = vector.shape_cast %39 : vector<1x64x16xf32> to vector<64x16xf32>
      %41 = vector.extract_strided_slice %38 {offsets = [0, 0, 0], sizes = [1, 64, 1], strides = [1, 1, 1]} : vector<2x64x1xf32> to vector<1x64x1xf32>
      %42 = vector.shape_cast %41 : vector<1x64x1xf32> to vector<64x1xf32>
      %43 = vector.broadcast %42 : vector<64x1xf32> to vector<64x16xf32>
      %44 = arith.mulf %40, %43 : vector<64x16xf32>
      %45 = arith.truncf %44 : vector<64x16xf32> to vector<64x16xbf16>
      %c0_36 = arith.constant 0 : index
      %c0_37 = arith.constant 0 : index
      %46 = vector.load %arg18[%c0_36, %c0_37] : memref<64x128xbf16, #tpu.memory_space<vmem>>, vector<64x16xbf16>
      tpu.vector_store %arg18[%c0_36, %c0_37], %45 {strides = array<i32>} : memref<64x128xbf16, #tpu.memory_space<vmem>>, vector<64x16xbf16>,
      %c1 = arith.constant 1 : index
      %c0_38 = arith.constant 0 : index
      %c0_39 = arith.constant 0 : index
      %47 = vector.load %arg17[%c1, %c0_38, %c0_39] : memref<2x64x16xf32, #tpu.memory_space<vmem>>, vector<1x64x16xf32>
      %48 = vector.shape_cast %47 : vector<1x64x16xf32> to vector<64x16xf32>
      %49 = vector.extract_strided_slice %38 {offsets = [1, 0, 0], sizes = [1, 64, 1], strides = [1, 1, 1]} : vector<2x64x1xf32> to vector<1x64x1xf32>
      %50 = vector.shape_cast %49 : vector<1x64x1xf32> to vector<64x1xf32>
      %51 = vector.broadcast %50 : vector<64x1xf32> to vector<64x16xf32>
      %52 = arith.mulf %48, %51 : vector<64x16xf32>
      %53 = arith.truncf %52 : vector<64x16xf32> to vector<64x16xbf16>
      %c0_40 = arith.constant 0 : index
      %c16 = arith.constant 16 : index
      %54 = vector.load %arg18[%c0_40, %c16] : memref<64x128xbf16, #tpu.memory_space<vmem>>, vector<64x16xbf16>
      tpu.vector_store %arg18[%c0_40, %c16], %53 {strides = array<i32>} : memref<64x128xbf16, #tpu.memory_space<vmem>>, vector<64x16xbf16>,
      %c0_41 = arith.constant 0 : index
      %c0_42 = arith.constant 0 : index
      %c0_43 = arith.constant 0 : index
      %55 = vector.load %arg2[%c0_41, %c0_42, %c0_43] : memref<1x64x128xf32, #tpu.memory_space<vmem>>, vector<1x64x128xf32>
      %56 = vector.shape_cast %55 : vector<1x64x128xf32> to vector<64x128xf32>
      %c0_44 = arith.constant 0 : index
      %c0_45 = arith.constant 0 : index
      %57 = vector.load %arg18[%c0_44, %c0_45] : memref<64x128xbf16, #tpu.memory_space<vmem>>, vector<64x128xbf16>
      %c0_46 = arith.constant 0 : index
      %c0_47 = arith.constant 0 : index
      %58 = vector.load %arg9[%c0_46, %c0_47] : memref<128x128xbf16, #tpu.memory_space<vmem>>, vector<128x128xbf16>
      %cst_48 = arith.constant dense<0.000000e+00> : vector<64x128xf32>
      %59 = tpu.matmul %57, %58, %cst_48 {dimension_numbers = #tpu.dot_dimension_numbers<[1], [0], [0], [1], [0, 0, 1, 1], [], []>} : vector<64x128xbf16>, vector<128x128xbf16>, vector<64x128xf32> -> vector<64x128xf32>
      %c0_49 = arith.constant 0 : index
      %c0_50 = arith.constant 0 : index
      %60 = vector.load %arg10[%c0_49, %c0_50] : memref<1x128xf32, #tpu.memory_space<vmem>>, vector<1x128xf32>
      %61 = vector.broadcast %60 : vector<1x128xf32> to vector<64x128xf32>
      %62 = arith.addf %59, %61 : vector<64x128xf32>
      %63 = arith.addf %62, %56 : vector<64x128xf32>
      %c0_51 = arith.constant 0 : index
      %c0_52 = arith.constant 0 : index
      %c0_53 = arith.constant 0 : index
      %64 = vector.load %arg11[%c0_51, %c0_52, %c0_53] : memref<1x64x128xf32, #tpu.memory_space<vmem>>, vector<1x64x128xf32>
      %65 = vector.shape_cast %64 : vector<1x64x128xf32> to vector<64x128xf32>
      %66 = vector.shape_cast %63 : vector<64x128xf32> to vector<1x64x128xf32>
      tpu.vector_store %arg11[%c0_51, %c0_52, %c0_53], %66 {strides = array<i32>} : memref<1x64x128xf32, #tpu.memory_space<vmem>>, vector<1x64x128xf32>,
    } else {
    }
    return
  }
  func.func @transform_0(%arg0: i32, %arg1: i32) -> (i32, i32, i32) {
    %c0_i32 = arith.constant 0 : i32
    %c0_i32_0 = arith.constant 0 : i32
    %c0_i32_1 = arith.constant 0 : i32
    return %arg0, %c0_i32, %c0_i32_0 : i32, i32, i32
  }
  func.func @transform_1(%arg0: i32, %arg1: i32) -> (i32, i32) {
    %c0_i32 = arith.constant 0 : i32
    %c0_i32_0 = arith.constant 0 : i32
    %c0_i32_1 = arith.constant 0 : i32
    return %c0_i32, %c0_i32_0 : i32, i32
  }
  func.func @transform_2(%arg0: i32, %arg1: i32) -> (i32, i32) {
    %c0_i32 = arith.constant 0 : i32
    %c0_i32_0 = arith.constant 0 : i32
    %c0_i32_1 = arith.constant 0 : i32
    return %c0_i32, %c0_i32_0 : i32, i32
  }
  func.func @transform_3(%arg0: i32, %arg1: i32) -> (i32, i32) {
    %c0_i32 = arith.constant 0 : i32
    %c0_i32_0 = arith.constant 0 : i32
    %c0_i32_1 = arith.constant 0 : i32
    return %c0_i32, %c0_i32_0 : i32, i32
  }
  func.func @transform_4(%arg0: i32, %arg1: i32) -> (i32, i32) {
    %c0_i32 = arith.constant 0 : i32
    %c0_i32_0 = arith.constant 0 : i32
    %c0_i32_1 = arith.constant 0 : i32
    return %c0_i32, %c0_i32_0 : i32, i32
  }
  func.func @transform_5(%arg0: i32, %arg1: i32) -> (i32, i32) {
    %c0_i32 = arith.constant 0 : i32
    %c0_i32_0 = arith.constant 0 : i32
    %c0_i32_1 = arith.constant 0 : i32
    return %c0_i32, %c0_i32_0 : i32, i32
  }
  func.func @transform_6(%arg0: i32, %arg1: i32) -> (i32, i32) {
    %c0_i32 = arith.constant 0 : i32
    %c0_i32_0 = arith.constant 0 : i32
    %c0_i32_1 = arith.constant 0 : i32
    return %c0_i32, %c0_i32_0 : i32, i32
  }
  func.func @transform_7(%arg0: i32, %arg1: i32) -> (i32, i32) {
    %c0_i32 = arith.constant 0 : i32
    %c0_i32_0 = arith.constant 0 : i32
    %c0_i32_1 = arith.constant 0 : i32
    return %c0_i32, %c0_i32_0 : i32, i32
  }
  func.func @transform_8(%arg0: i32, %arg1: i32) -> (i32, i32) {
    %c0_i32 = arith.constant 0 : i32
    %c0_i32_0 = arith.constant 0 : i32
    %c0_i32_1 = arith.constant 0 : i32
    return %c0_i32, %c0_i32_0 : i32, i32
  }
  func.func @transform_9(%arg0: i32, %arg1: i32) -> (i32, i32, i32) {
    %c0_i32 = arith.constant 0 : i32
    %c0_i32_0 = arith.constant 0 : i32
    %c0_i32_1 = arith.constant 0 : i32
    return %arg0, %c0_i32, %c0_i32_0 : i32, i32, i32
  }
}

</mosaic_0001>

<llo_original>
// kernel: tpu_custom_call.1
$region0: #{tpu_custom_call.1}
  #allocation0 [shape = 'u32[]', space=smem, size = 0x4, offset = 0x4, fixed_abs, tag = 'smem constant byte address 0x4 - core index']
  #allocation1 [shape = 'u32[144,128]{1,0:T(1,128)}', space=vmem, size = 0x12000, scoped, tag = 'internal scratch']
  #allocation2 [shape = 'bf16[2,64,16]{2,1,0:T(16,128)(2,1)}', space=vmem, size = 0x8000, scoped, tag = 'scratch operand']
  #allocation3 [shape = 'bf16[2,64,16]{2,1,0:T(16,128)(2,1)}', space=vmem, size = 0x8000, scoped, tag = 'scratch operand']
  #allocation4 [shape = 'bf16[2,64,16]{2,1,0:T(16,128)(2,1)}', space=vmem, size = 0x8000, scoped, tag = 'scratch operand']
  #allocation5 [shape = 'f32[2,64,1]{2,1,0:T(8,128)}', space=vmem, size = 0x10000, scoped, tag = 'scratch operand']
  #allocation6 [shape = 'f32[2,64,1]{2,1,0:T(8,128)}', space=vmem, size = 0x10000, scoped, tag = 'scratch operand']
  #allocation7 [shape = 'f32[2,64,16]{2,1,0:T(8,128)}', space=vmem, size = 0x10000, scoped, tag = 'scratch operand']
  #allocation8 [shape = 'bf16[64,128]{1,0:T(16,128)(2,1)}', space=vmem, size = 0x4000, scoped, tag = 'scratch operand']
  %s0 = inlined_call_operand.hbm [shape: f32[2,64,128], index: 0, kind: input, shape index: {}]
  %s1 = inlined_call_operand.hbm [shape: f32[1,128], index: 1, kind: input, shape index: {}]
  %s2 = inlined_call_operand.hbm [shape: f32[1,128], index: 2, kind: input, shape index: {}]
  %s3 = inlined_call_operand.hbm [shape: f32[128,128], index: 3, kind: input, shape index: {}]
  %s4 = inlined_call_operand.hbm [shape: bf16[128,128], index: 4, kind: input, shape index: {}]
  %s5 = inlined_call_operand.hbm [shape: bf16[128,128], index: 5, kind: input, shape index: {}]
  %s6 = inlined_call_operand.hbm [shape: bf16[128,128], index: 6, kind: input, shape index: {}]
  %s7 = inlined_call_operand.hbm [shape: bf16[128,128], index: 7, kind: input, shape index: {}]
  %s8 = inlined_call_operand.hbm [shape: f32[1,128], index: 8, kind: input, shape index: {}]
  %s9 = inlined_call_operand.hbm [shape: f32[2,64,128], index: 9, kind: output, shape index: {}]
  %s10 = sld [smem:[#allocation0]]
  $region113: #{tpu_custom_call.1} parent=0
    _
  %s12 = ssub.s32 1, %s10
  %s13 = scalar_select 0, %s12, %s10
  $region1: #{tpu_custom_call.1} parent=0
    #allocation9 [shape = 'u8[65536]{0}', space=vmem, size = 0x10000, scoped, tag = 'input window, operand 0']
    #allocation10 [shape = 's32[2]{0}', space=sflag, size = 0x8, scoped, tag = 'scoped memory for tpu_custom_call.1']
    #allocation11 [shape = 's32[2]{0}', space=sflag, size = 0x8, scoped, tag = 'scoped memory for tpu_custom_call.1']
    #allocation12 [shape = 'u8[512]{0}', space=vmem, size = 0x400, scoped, tag = 'input window, operand 1, single buffered']
    #allocation13 [shape = 's32[1]{0}', space=sflag, size = 0x4, scoped, tag = 'scoped memory for tpu_custom_call.1']
    #allocation14 [shape = 'u8[512]{0}', space=vmem, size = 0x400, scoped, tag = 'input window, operand 2, single buffered']
    #allocation15 [shape = 'u8[65536]{0}', space=vmem, size = 0x10000, scoped, tag = 'input window, operand 3, single buffered']
    #allocation16 [shape = 's32[1]{0}', space=sflag, size = 0x4, scoped, tag = 'scoped memory for tpu_custom_call.1']
    #allocation17 [shape = 'u8[32768]{0}', space=vmem, size = 0x8000, scoped, tag = 'input window, operand 4, single buffered']
    #allocation18 [shape = 'u8[32768]{0}', space=vmem, size = 0x8000, scoped, tag = 'input window, operand 5, single buffered']
    #allocation19 [shape = 's32[1]{0}', space=sflag, size = 0x4, scoped, tag = 'scoped memory for tpu_custom_call.1']
    #allocation20 [shape = 'u8[32768]{0}', space=vmem, size = 0x8000, scoped, tag = 'input window, operand 6, single buffered']
    #allocation21 [shape = 'u8[32768]{0}', space=vmem, size = 0x8000, scoped, tag = 'input window, operand 7, single buffered']
    #allocation22 [shape = 's32[1]{0}', space=sflag, size = 0x4, scoped, tag = 'scoped memory for tpu_custom_call.1']
    #allocation23 [shape = 'u8[512]{0}', space=vmem, size = 0x400, scoped, tag = 'input window, operand 8, single buffered']
    #allocation24 [shape = 'u8[65536]{0}', space=vmem, size = 0x10000, scoped, tag = 'output window, operand 0']
    %14 = vsyncpa [#allocation10], 0
    %s15 = scalar_lea.sflag [#allocation10], 1
    %16 = vsyncpa %s15, 0
    %17 = vsyncpa [#allocation13], 0
    %18 = vsyncpa [#allocation16], 0
    %19 = vsyncpa [#allocation19], 0
    %20 = vsyncpa [#allocation22], 0
    %21 = vsyncpa [#allocation11], 0
    %s22 = scalar_lea.sflag [#allocation11], 1
    %23 = vsyncpa %s22, 0
    loop: start=0, step=1, limit=4
    $region2: #{tpu_custom_call.1} parent=1 // loop_pre_header
      _
    $region3: #{tpu_custom_call.1} parent=1 // loop_header
      %s25 = sphi 0, %s29
      %p26 = scmp.ge.s32.totalorder %s25, 4
      %s32 = sphi 0, %s44
      %s33 = sphi 0, %s40
      %s34 = sphi 0, %s32
      %s35 = sphi 0, %s33
      %s36 = sphi 0, %s34
      %s37 = sphi 0, %s35
      %s47 = sphi 0, %s49
      %s50 = sphi 0, %s47
      %s51 = sphi 0, %s50
      %s67 = sphi 0, %s51
      %s71 = sphi 0, %s71
      %s73 = sphi 0, %s71
      %s74 = sphi 0, %s73
      %s88 = sphi 0, %s74
      %s92 = sphi 0, %s92
      %s94 = sphi 0, %s92
      %s95 = sphi 0, %s94
      %s109 = sphi 0, %s95
      %s113 = sphi 0, %s113
      %s115 = sphi 0, %s113
      %s116 = sphi 0, %s115
      %s130 = sphi 0, %s116
      %s134 = sphi 0, %s134
      %s136 = sphi 0, %s134
      %s137 = sphi 0, %s136
      %s151 = sphi 0, %s137
      %s155 = sphi 0, %s155
      %s157 = sphi 0, %s155
      %s158 = sphi 0, %s157
      %s172 = sphi 0, %s158
      %s176 = sphi 0, %s176
      %s178 = sphi 0, %s176
      %s179 = sphi 0, %s178
      %s193 = sphi 0, %s179
      %s197 = sphi 0, %s197
      %s199 = sphi 0, %s197
      %s200 = sphi 0, %s199
      %s214 = sphi 0, %s200
      %s218 = sphi 0, %s218
      %s220 = sphi 0, %s218
      %s221 = sphi 0, %s220
      %s235 = sphi 0, %s221
      %s241 = sphi 0, %s243
      %s244 = sphi 0, %s241
      %s245 = sphi 0, %s244
      %s261 = sphi 0, %s245
    $region4: #{tpu_custom_call.1} parent=1 // loop_header_branch
      %28 = sbr.rel (%p26) target = $region8
    $region5: #{tpu_custom_call.1} parent=1 // loop_body
      %s30 = ssub.s32 %s25, 1
      %s31 = ssub.s32 %s25, 2
      %s38 = sadd.s32 1, %s33
      %p39 = scmp.ge.s32.totalorder %s38, 1
      %s40 = scalar_select %p39, 0, %s38
      %s41 = sadd.s32 1, %s32
      %s42 = scalar_select %p39, %s41, %s32
      %p43 = scmp.ge.s32.totalorder %s42, 2
      %s44 = scalar_select %p43, 0, %s42
      %s45 = ssub.s32 %s32, %s44
      %p46 = scmp.eq.s32.totalorder %s45, 0
      %s48 = sadd.s32 %s47, 1
      %s49 = scalar_select %p46, %s47, %s48
      %p52 = pneg %p46
      %p53 = scmp.eq.s32.totalorder %s25, 1
      %p54 = por %p52, %p53
      %p55 = scmp.ne.s32.totalorder %s47, %s50
      %p56 = scmp.eq.s32.totalorder %s25, 0
      %p57 = por %p55, %p56
      %p58 = scmp.ne.s32.totalorder %s47, %s50
      %p59 = scmp.eq.s32.totalorder %s30, 1
      %p60 = por %p58, %p59
      %p61 = scmp.ne.s32.totalorder %s50, %s51
      %p62 = scmp.eq.s32.totalorder %s30, 0
      %p63 = por %p61, %p62
      %p64 = scmp.ne.s32.totalorder %s50, %s51
      %p65 = scmp.eq.s32.totalorder %s31, 1
      %p66 = por %p64, %p65
      %p68 = scmp.ne.s32.totalorder %s51, %s67
      %p69 = scmp.eq.s32.totalorder %s31, 0
      %p70 = por %p68, %p69
      %s72 = sadd.s32 %s71, 1
      %p75 = scmp.eq.s32.totalorder %s25, 1
      %p76 = scmp.ne.s32.totalorder %s71, %s73
      %p77 = scmp.eq.s32.totalorder %s25, 0
      %p78 = por %p76, %p77
      %p79 = scmp.ne.s32.totalorder %s71, %s73
      %p80 = scmp.eq.s32.totalorder %s30, 1
      %p81 = por %p79, %p80
      %p82 = scmp.ne.s32.totalorder %s73, %s74
      %p83 = scmp.eq.s32.totalorder %s30, 0
      %p84 = por %p82, %p83
      %p85 = scmp.ne.s32.totalorder %s73, %s74
      %p86 = scmp.eq.s32.totalorder %s31, 1
      %p87 = por %p85, %p86
      %p89 = scmp.ne.s32.totalorder %s74, %s88
      %p90 = scmp.eq.s32.totalorder %s31, 0
      %p91 = por %p89, %p90
      %s93 = sadd.s32 %s92, 1
      %p96 = scmp.eq.s32.totalorder %s25, 1
      %p97 = scmp.ne.s32.totalorder %s92, %s94
      %p98 = scmp.eq.s32.totalorder %s25, 0
      %p99 = por %p97, %p98
      %p100 = scmp.ne.s32.totalorder %s92, %s94
      %p101 = scmp.eq.s32.totalorder %s30, 1
      %p102 = por %p100, %p101
      %p103 = scmp.ne.s32.totalorder %s94, %s95
      %p104 = scmp.eq.s32.totalorder %s30, 0
      %p105 = por %p103, %p104
      %p106 = scmp.ne.s32.totalorder %s94, %s95
      %p107 = scmp.eq.s32.totalorder %s31, 1
      %p108 = por %p106, %p107
      %p110 = scmp.ne.s32.totalorder %s95, %s109
      %p111 = scmp.eq.s32.totalorder %s31, 0
      %p112 = por %p110, %p111
      %s114 = sadd.s32 %s113, 1
      %p117 = scmp.eq.s32.totalorder %s25, 1
      %p118 = scmp.ne.s32.totalorder %s113, %s115
      %p119 = scmp.eq.s32.totalorder %s25, 0
      %p120 = por %p118, %p119
      %p121 = scmp.ne.s32.totalorder %s113, %s115
      %p122 = scmp.eq.s32.totalorder %s30, 1
      %p123 = por %p121, %p122
      %p124 = scmp.ne.s32.totalorder %s115, %s116
      %p125 = scmp.eq.s32.totalorder %s30, 0
      %p126 = por %p124, %p125
      %p127 = scmp.ne.s32.totalorder %s115, %s116
      %p128 = scmp.eq.s32.totalorder %s31, 1
      %p129 = por %p127, %p128
      %p131 = scmp.ne.s32.totalorder %s116, %s130
      %p132 = scmp.eq.s32.totalorder %s31, 0
      %p133 = por %p131, %p132
      %s135 = sadd.s32 %s134, 1
      %p138 = scmp.eq.s32.totalorder %s25, 1
      %p139 = scmp.ne.s32.totalorder %s134, %s136
      %p140 = scmp.eq.s32.totalorder %s25, 0
      %p141 = por %p139, %p140
      %p142 = scmp.ne.s32.totalorder %s134, %s136
      %p143 = scmp.eq.s32.totalorder %s30, 1
      %p144 = por %p142, %p143
      %p145 = scmp.ne.s32.totalorder %s136, %s137
      %p146 = scmp.eq.s32.totalorder %s30, 0
      %p147 = por %p145, %p146
      %p148 = scmp.ne.s32.totalorder %s136, %s137
      %p149 = scmp.eq.s32.totalorder %s31, 1
      %p150 = por %p148, %p149
      %p152 = scmp.ne.s32.totalorder %s137, %s151
      %p153 = scmp.eq.s32.totalorder %s31, 0
      %p154 = por %p152, %p153
      %s156 = sadd.s32 %s155, 1
      %p159 = scmp.eq.s32.totalorder %s25, 1
      %p160 = scmp.ne.s32.totalorder %s155, %s157
      %p161 = scmp.eq.s32.totalorder %s25, 0
      %p162 = por %p160, %p161
      %p163 = scmp.ne.s32.totalorder %s155, %s157
      %p164 = scmp.eq.s32.totalorder %s30, 1
      %p165 = por %p163, %p164
      %p166 = scmp.ne.s32.totalorder %s157, %s158
      %p167 = scmp.eq.s32.totalorder %s30, 0
      %p168 = por %p166, %p167
      %p169 = scmp.ne.s32.totalorder %s157, %s158
      %p170 = scmp.eq.s32.totalorder %s31, 1
      %p171 = por %p169, %p170
      %p173 = scmp.ne.s32.totalorder %s158, %s172
      %p174 = scmp.eq.s32.totalorder %s31, 0
      %p175 = por %p173, %p174
      %s177 = sadd.s32 %s176, 1
      %p180 = scmp.eq.s32.totalorder %s25, 1
      %p181 = scmp.ne.s32.totalorder %s176, %s178
      %p182 = scmp.eq.s32.totalorder %s25, 0
      %p183 = por %p181, %p182
      %p184 = scmp.ne.s32.totalorder %s176, %s178
      %p185 = scmp.eq.s32.totalorder %s30, 1
      %p186 = por %p184, %p185
      %p187 = scmp.ne.s32.totalorder %s178, %s179
      %p188 = scmp.eq.s32.totalorder %s30, 0
      %p189 = por %p187, %p188
      %p190 = scmp.ne.s32.totalorder %s178, %s179
      %p191 = scmp.eq.s32.totalorder %s31, 1
      %p192 = por %p190, %p191
      %p194 = scmp.ne.s32.totalorder %s179, %s193
      %p195 = scmp.eq.s32.totalorder %s31, 0
      %p196 = por %p194, %p195
      %s198 = sadd.s32 %s197, 1
      %p201 = scmp.eq.s32.totalorder %s25, 1
      %p202 = scmp.ne.s32.totalorder %s197, %s199
      %p203 = scmp.eq.s32.totalorder %s25, 0
      %p204 = por %p202, %p203
      %p205 = scmp.ne.s32.totalorder %s197, %s199
      %p206 = scmp.eq.s32.totalorder %s30, 1
      %p207 = por %p205, %p206
      %p208 = scmp.ne.s32.totalorder %s199, %s200
      %p209 = scmp.eq.s32.totalorder %s30, 0
      %p210 = por %p208, %p209
      %p211 = scmp.ne.s32.totalorder %s199, %s200
      %p212 = scmp.eq.s32.totalorder %s31, 1
      %p213 = por %p211, %p212
      %p215 = scmp.ne.s32.totalorder %s200, %s214
      %p216 = scmp.eq.s32.totalorder %s31, 0
      %p217 = por %p215, %p216
      %s219 = sadd.s32 %s218, 1
      %p222 = scmp.eq.s32.totalorder %s25, 1
      %p223 = scmp.ne.s32.totalorder %s218, %s220
      %p224 = scmp.eq.s32.totalorder %s25, 0
      %p225 = por %p223, %p224
      %p226 = scmp.ne.s32.totalorder %s218, %s220
      %p227 = scmp.eq.s32.totalorder %s30, 1
      %p228 = por %p226, %p227
      %p229 = scmp.ne.s32.totalorder %s220, %s221
      %p230 = scmp.eq.s32.totalorder %s30, 0
      %p231 = por %p229, %p230
      %p232 = scmp.ne.s32.totalorder %s220, %s221
      %p233 = scmp.eq.s32.totalorder %s31, 1
      %p234 = por %p232, %p233
      %p236 = scmp.ne.s32.totalorder %s221, %s235
      %p237 = scmp.eq.s32.totalorder %s31, 0
      %p238 = por %p236, %p237
      %s239 = ssub.s32 %s32, %s44
      %p240 = scmp.eq.s32.totalorder %s239, 0
      %s242 = sadd.s32 %s241, 1
      %s243 = scalar_select %p240, %s241, %s242
      %p246 = pneg %p240
      %p247 = scmp.eq.s32.totalorder %s25, 1
      %p248 = por %p246, %p247
      %p249 = scmp.ne.s32.totalorder %s241, %s244
      %p250 = scmp.eq.s32.totalorder %s25, 0
      %p251 = por %p249, %p250
      %p252 = scmp.ne.s32.totalorder %s241, %s244
      %p253 = scmp.eq.s32.totalorder %s30, 1
      %p254 = por %p252, %p253
      %p255 = scmp.ne.s32.totalorder %s244, %s245
      %p256 = scmp.eq.s32.totalorder %s30, 0
      %p257 = por %p255, %p256
      %p258 = scmp.ne.s32.totalorder %s244, %s245
      %p259 = scmp.eq.s32.totalorder %s31, 1
      %p260 = por %p258, %p259
      %p262 = scmp.ne.s32.totalorder %s245, %s261
      %p263 = scmp.eq.s32.totalorder %s31, 0
      %p264 = por %p262, %p263
      %p265 = scmp.le.s32.totalorder 1, %s25
      %p266 = scmp.lt.s32.totalorder %s25, 3
      %p267 = pnand %p265, %p266
      %p268 = pneg %p267
      // Predicated region
      $region9: #{tpu_custom_call.1} parent=5 // pred_check
        _
      $region10: #{tpu_custom_call.1} parent=5 // pred_check_branch
        %270 = sbr.rel (%p267) target = $region12
      $region11: #{tpu_custom_call.1} parent=5 // pred_region
        %s271 = ssub.s32 %s25, 1
        // Predicated region
        $region13: #{tpu_custom_call.1} parent=11 // pred_check
          %p272 = pneg %p84
        $region14: #{tpu_custom_call.1} parent=11 // pred_check_branch
          %274 = sbr.rel (%p272) target = $region16
        $region15: #{tpu_custom_call.1} parent=11 // pred_region
          %s276 = ssub.s32 16, 16
          %277 = vsyncadd [#allocation13], %s276
          %s279 = sshll.u32 [#allocation12], 4
          %s280 = int_to_ptr.vmem [resolvable:$true] %s279
          %282 = dma.hbm_to_vmem [thread:$0]  %s1, 16, %s280, [#allocation13]
        $region16: #{tpu_custom_call.1} parent=11 // pred_fallthru
          _
        // Predicated region
        $region17: #{tpu_custom_call.1} parent=11 // pred_check
          %p283 = pneg %p105
        $region18: #{tpu_custom_call.1} parent=11 // pred_check_branch
          %285 = sbr.rel (%p283) target = $region20
        $region19: #{tpu_custom_call.1} parent=11 // pred_region
          %s287 = ssub.s32 16, 16
          %288 = vsyncadd [#allocation13], %s287
          %s290 = sshll.u32 [#allocation14], 4
          %s291 = int_to_ptr.vmem [resolvable:$true] %s290
          %293 = dma.hbm_to_vmem [thread:$0]  %s2, 16, %s291, [#allocation13]
        $region20: #{tpu_custom_call.1} parent=11 // pred_fallthru
          _
        // Predicated region
        $region21: #{tpu_custom_call.1} parent=11 // pred_check
          %p294 = pneg %p126
        $region22: #{tpu_custom_call.1} parent=11 // pred_check_branch
          %296 = sbr.rel (%p294) target = $region24
        $region23: #{tpu_custom_call.1} parent=11 // pred_region
          %s298 = ssub.s32 2048, 2048
          %299 = vsyncadd [#allocation16], %s298
          %s300 = sshll.u32 [#allocation15], 4
          %s301 = int_to_ptr.vmem [resolvable:$true] %s300
          %306 = dma.hbm_to_vmem [thread:$0]  %s3, 2048, %s301, [#allocation16], 128, 128, 8
        $region24: #{tpu_custom_call.1} parent=11 // pred_fallthru
          _
        // Predicated region
        $region25: #{tpu_custom_call.1} parent=11 // pred_check
          %p307 = pneg %p147
        $region26: #{tpu_custom_call.1} parent=11 // pred_check_branch
          %309 = sbr.rel (%p307) target = $region28
        $region27: #{tpu_custom_call.1} parent=11 // pred_region
          %s311 = ssub.s32 1024, 1024
          %312 = vsyncadd [#allocation16], %s311
          %s313 = sshll.u32 [#allocation17], 4
          %s314 = int_to_ptr.vmem [resolvable:$true] %s313
          %319 = dma.hbm_to_vmem [thread:$0]  %s4, 1024, %s314, [#allocation16], 64, 64, 4
        $region28: #{tpu_custom_call.1} parent=11 // pred_fallthru
          _
        // Predicated region
        $region29: #{tpu_custom_call.1} parent=11 // pred_check
          %p320 = pneg %p168
        $region30: #{tpu_custom_call.1} parent=11 // pred_check_branch
          %322 = sbr.rel (%p320) target = $region32
        $region31: #{tpu_custom_call.1} parent=11 // pred_region
          %s324 = ssub.s32 1024, 1024
          %325 = vsyncadd [#allocation19], %s324
          %s326 = sshll.u32 [#allocation18], 4
          %s327 = int_to_ptr.vmem [resolvable:$true] %s326
          %332 = dma.hbm_to_vmem [thread:$0]  %s5, 1024, %s327, [#allocation19], 64, 64, 4
        $region32: #{tpu_custom_call.1} parent=11 // pred_fallthru
          _
        // Predicated region
        $region33: #{tpu_custom_call.1} parent=11 // pred_check
          %p333 = pneg %p189
        $region34: #{tpu_custom_call.1} parent=11 // pred_check_branch
          %335 = sbr.rel (%p333) target = $region36
        $region35: #{tpu_custom_call.1} parent=11 // pred_region
          %s337 = ssub.s32 1024, 1024
          %338 = vsyncadd [#allocation19], %s337
          %s339 = sshll.u32 [#allocation20], 4
          %s340 = int_to_ptr.vmem [resolvable:$true] %s339
          %345 = dma.hbm_to_vmem [thread:$0]  %s6, 1024, %s340, [#allocation19], 64, 64, 4
        $region36: #{tpu_custom_call.1} parent=11 // pred_fallthru
          _
        // Predicated region
        $region37: #{tpu_custom_call.1} parent=11 // pred_check
          %p346 = pneg %p210
        $region38: #{tpu_custom_call.1} parent=11 // pred_check_branch
          %348 = sbr.rel (%p346) target = $region40
        $region39: #{tpu_custom_call.1} parent=11 // pred_region
          %s350 = ssub.s32 1024, 1024
          %351 = vsyncadd [#allocation22], %s350
          %s352 = sshll.u32 [#allocation21], 4
          %s353 = int_to_ptr.vmem [resolvable:$true] %s352
          %358 = dma.hbm_to_vmem [thread:$0]  %s7, 1024, %s353, [#allocation22], 64, 64, 4
        $region40: #{tpu_custom_call.1} parent=11 // pred_fallthru
          _
        // Predicated region
        $region41: #{tpu_custom_call.1} parent=11 // pred_check
          %p359 = pneg %p231
        $region42: #{tpu_custom_call.1} parent=11 // pred_check_branch
          %361 = sbr.rel (%p359) target = $region44
        $region43: #{tpu_custom_call.1} parent=11 // pred_region
          %s363 = ssub.s32 16, 16
          %364 = vsyncadd [#allocation22], %s363
          %s366 = sshll.u32 [#allocation23], 4
          %s367 = int_to_ptr.vmem [resolvable:$true] %s366
          %369 = dma.hbm_to_vmem [thread:$0]  %s8, 16, %s367, [#allocation22]
        $region44: #{tpu_custom_call.1} parent=11 // pred_fallthru
          _
      $region12: #{tpu_custom_call.1} parent=5 // pred_fallthru
        _
      %p370 = scmp.lt.s32.totalorder %s25, 2
      // Predicated region
      $region45: #{tpu_custom_call.1} parent=5 // pred_check
        %p371 = pneg %p370
      $region46: #{tpu_custom_call.1} parent=5 // pred_check_branch
        %373 = sbr.rel (%p371) target = $region48
      $region47: #{tpu_custom_call.1} parent=5 // pred_region
        // Predicated region
        $region49: #{tpu_custom_call.1} parent=47 // pred_check
          %p374 = pneg %p57
        $region50: #{tpu_custom_call.1} parent=47 // pred_check_branch
          %376 = sbr.rel (%p374) target = $region52
        $region51: #{tpu_custom_call.1} parent=47 // pred_region
          %s377 = sand.u32 %s47, 1
          %s378 = scalar_lea.sflag [#allocation10], %s377
          %s379 = sand.u32 %s47, 1
          %s380 = smul.addr %s379, 64
          %s381 = scalar_lea.vmem [#allocation9], %s380
          %s383 = ssub.s32 1024, 1024
          %384 = vsyncadd %s378, %s383
          %s385 = smul.addr %s32, 8
          %s386 = smul.addr %s385, 128
          %s387 = scalar_lea.hbm %s0, %s386
          %s388 = sshll.u32 %s381, 4
          %s389 = int_to_ptr.vmem [resolvable:$true] %s388
          %394 = dma.hbm_to_vmem [thread:$0]  %s387, 1024, %s389, %s378, 128, 128, 8
        $region52: #{tpu_custom_call.1} parent=47 // pred_fallthru
          _
      $region48: #{tpu_custom_call.1} parent=5 // pred_fallthru
        _
      %p395 = scmp.le.s32.totalorder 1, %s25
      %p396 = scmp.lt.s32.totalorder %s25, 3
      %p397 = pnand %p395, %p396
      %p398 = pneg %p397
      // Predicated region
      $region53: #{tpu_custom_call.1} parent=5 // pred_check
        _
      $region54: #{tpu_custom_call.1} parent=5 // pred_check_branch
        %400 = sbr.rel (%p397) target = $region56
      $region55: #{tpu_custom_call.1} parent=5 // pred_region
        %s401 = ssub.s32 %s25, 1
        %s402 = sand.u32 %s50, 1
        %s403 = scalar_lea.sflag [#allocation10], %s402
        %s404 = sand.u32 %s50, 1
        %s405 = smul.addr %s404, 64
        %s406 = scalar_lea.vmem [#allocation9], %s405
        // Predicated region
        $region57: #{tpu_custom_call.1} parent=55 // pred_check
          %p407 = pneg %p63
        $region58: #{tpu_custom_call.1} parent=55 // pred_check_branch
          %409 = sbr.rel (%p407) target = $region60
        $region59: #{tpu_custom_call.1} parent=55 // pred_region
          %410 = dma.done %s403, 1024
        $region60: #{tpu_custom_call.1} parent=55 // pred_fallthru
          _
        // Predicated region
        $region61: #{tpu_custom_call.1} parent=55 // pred_check
          %p411 = pneg %p84
        $region62: #{tpu_custom_call.1} parent=55 // pred_check_branch
          %413 = sbr.rel (%p411) target = $region64
        $region63: #{tpu_custom_call.1} parent=55 // pred_region
          %414 = dma.done [#allocation13], 16
        $region64: #{tpu_custom_call.1} parent=55 // pred_fallthru
          _
        // Predicated region
        $region65: #{tpu_custom_call.1} parent=55 // pred_check
          %p415 = pneg %p105
        $region66: #{tpu_custom_call.1} parent=55 // pred_check_branch
          %417 = sbr.rel (%p415) target = $region68
        $region67: #{tpu_custom_call.1} parent=55 // pred_region
          %418 = dma.done [#allocation13], 16
        $region68: #{tpu_custom_call.1} parent=55 // pred_fallthru
          _
        // Predicated region
        $region69: #{tpu_custom_call.1} parent=55 // pred_check
          %p419 = pneg %p126
        $region70: #{tpu_custom_call.1} parent=55 // pred_check_branch
          %421 = sbr.rel (%p419) target = $region72
        $region71: #{tpu_custom_call.1} parent=55 // pred_region
          %422 = dma.done [#allocation16], 2048
        $region72: #{tpu_custom_call.1} parent=55 // pred_fallthru
          _
        // Predicated region
        $region73: #{tpu_custom_call.1} parent=55 // pred_check
          %p423 = pneg %p147
        $region74: #{tpu_custom_call.1} parent=55 // pred_check_branch
          %425 = sbr.rel (%p423) target = $region76
        $region75: #{tpu_custom_call.1} parent=55 // pred_region
          %426 = dma.done [#allocation16], 1024
        $region76: #{tpu_custom_call.1} parent=55 // pred_fallthru
          _
        // Predicated region
        $region77: #{tpu_custom_call.1} parent=55 // pred_check
          %p427 = pneg %p168
        $region78: #{tpu_custom_call.1} parent=55 // pred_check_branch
          %429 = sbr.rel (%p427) target = $region80
        $region79: #{tpu_custom_call.1} parent=55 // pred_region
          %430 = dma.done [#allocation19], 1024
        $region80: #{tpu_custom_call.1} parent=55 // pred_fallthru
          _
        // Predicated region
        $region81: #{tpu_custom_call.1} parent=55 // pred_check
          %p431 = pneg %p189
        $region82: #{tpu_custom_call.1} parent=55 // pred_check_branch
          %433 = sbr.rel (%p431) target = $region84
        $region83: #{tpu_custom_call.1} parent=55 // pred_region
          %434 = dma.done [#allocation19], 1024
        $region84: #{tpu_custom_call.1} parent=55 // pred_fallthru
          _
        // Predicated region
        $region85: #{tpu_custom_call.1} parent=55 // pred_check
          %p435 = pneg %p210
        $region86: #{tpu_custom_call.1} parent=55 // pred_check_branch
          %437 = sbr.rel (%p435) target = $region88
        $region87: #{tpu_custom_call.1} parent=55 // pred_region
          %438 = dma.done [#allocation22], 1024
        $region88: #{tpu_custom_call.1} parent=55 // pred_fallthru
          _
        // Predicated region
        $region89: #{tpu_custom_call.1} parent=55 // pred_check
          %p439 = pneg %p231
        $region90: #{tpu_custom_call.1} parent=55 // pred_check_branch
          %441 = sbr.rel (%p439) target = $region92
        $region91: #{tpu_custom_call.1} parent=55 // pred_region
          %442 = dma.done [#allocation22], 16
        $region92: #{tpu_custom_call.1} parent=55 // pred_fallthru
          _
        %s443 = sand.u32 %s50, 1
        %s444 = scalar_lea.sflag [#allocation10], %s443
        %s445 = sand.u32 %s50, 1
        %s446 = smul.addr %s445, 64
        %s447 = scalar_lea.vmem [#allocation9], %s446
        %p448 = pneg %p63
        %p449 = pneg %p60
        %p450 = pneg %p84
        %p451 = pneg %p81
        %p452 = pneg %p105
        %p453 = pneg %p102
        %p454 = pneg %p126
        %p455 = pneg %p123
        %p456 = pneg %p147
        %p457 = pneg %p144
        %p458 = pneg %p168
        %p459 = pneg %p165
        %p460 = pneg %p189
        %p461 = pneg %p186
        %p462 = pneg %p210
        %p463 = pneg %p207
        %p464 = pneg %p231
        %p465 = pneg %p228
        %p466 = pneg %p257
        %p467 = pneg %p254
        %s468 = sand.u32 %s244, 1
        %s469 = scalar_lea.sflag [#allocation11], %s468
        %s470 = sand.u32 %s244, 1
        %s471 = smul.addr %s470, 64
        %s472 = scalar_lea.vmem [#allocation24], %s471
        %p474 = scmp.eq.s32.totalorder %s35, 0
        // Predicated region
        $region93: #{tpu_custom_call.1} parent=55 // pred_check
          %p475 = pneg %p474
        $region94: #{tpu_custom_call.1} parent=55 // pred_check_branch
          %477 = sbr.rel (%p475) target = $region96
        $region95: #{tpu_custom_call.1} parent=55 // pred_region
          %v478 = vld [vmem:[%s406] sm:$0xff]
          %v479 = vld [vmem:[%s406 + $0x8] sm:$0xff]
          %v480 = vld [vmem:[%s406 + $0x10] sm:$0xff]
          %v481 = vld [vmem:[%s406 + $0x18] sm:$0xff]
          %v482 = vld [vmem:[%s406 + $0x20] sm:$0xff]
          %v483 = vld [vmem:[%s406 + $0x28] sm:$0xff]
          %v484 = vld [vmem:[%s406 + $0x30] sm:$0xff]
          %v485 = vld [vmem:[%s406 + $0x38] sm:$0xff]
          %v486 = vadd.f32 %v478, %v479
          %v487 = vadd.f32 %v486, %v480
          %v488 = vadd.f32 %v487, %v481
          %v489 = vadd.f32 %v488, %v482
          %v490 = vadd.f32 %v489, %v483
          %v491 = vadd.f32 %v490, %v484
          %v492 = vadd.f32 %v491, %v485
          %v493 = vrot.slane %v492, 4
          %v494 = vadd.f32 %v492, %v493
          %v495 = vrot.slane %v494, 2
          %v496 = vadd.f32 %v494, %v495
          %v497 = vrot.slane %v496, 1
          %v498 = vadd.f32 %v496, %v497
          %v499 = vld [vmem:[#allocation15] sm:$0xff]
          %v500 = vld [vmem:[#allocation15 + $0x8] sm:$0xff]
          %v501 = vld [vmem:[#allocation15 + $0x10] sm:$0xff]
          %v502 = vld [vmem:[#allocation15 + $0x18] sm:$0xff]
          %v503 = vld [vmem:[#allocation15 + $0x20] sm:$0xff]
          %v504 = vld [vmem:[#allocation15 + $0x28] sm:$0xff]
          %v505 = vld [vmem:[#allocation15 + $0x30] sm:$0xff]
          %v506 = vld [vmem:[#allocation15 + $0x38] sm:$0xff]
          %v507 = vld [vmem:[#allocation15 + $0x40] sm:$0xff]
          %v508 = vld [vmem:[#allocation15 + $0x48] sm:$0xff]
          %v509 = vld [vmem:[#allocation15 + $0x50] sm:$0xff]
          %v510 = vld [vmem:[#allocation15 + $0x58] sm:$0xff]
          %v511 = vld [vmem:[#allocation15 + $0x60] sm:$0xff]
          %v512 = vld [vmem:[#allocation15 + $0x68] sm:$0xff]
          %v513 = vld [vmem:[#allocation15 + $0x70] sm:$0xff]
          %v514 = vld [vmem:[#allocation15 + $0x78] sm:$0xff]
          %515 = vmatprep.subr.mxu0 0.0
          %516 = vmatpush1.msra.mxu0 %v499
          %517 = vmatprep.subr.mxu0 0.0
          %518 = vmatpush1.msra.mxu0 %v500
          %519 = vmatprep.subr.mxu0 0.0
          %520 = vmatpush1.msra.mxu0 %v501
          %521 = vmatprep.subr.mxu0 0.0
          %522 = vmatpush1.msra.mxu0 %v502
          %523 = vmatprep.subr.mxu0 0.0
          %524 = vmatpush1.msra.mxu0 %v503
          %525 = vmatprep.subr.mxu0 0.0
          %526 = vmatpush1.msra.mxu0 %v504
          %527 = vmatprep.subr.mxu0 0.0
          %528 = vmatpush1.msra.mxu0 %v505
          %529 = vmatprep.subr.mxu0 0.0
          %530 = vmatpush1.msra.mxu0 %v506
          %531 = vmatprep.subr.mxu0 0.0
          %532 = vmatpush1.msra.mxu0 %v507
          %533 = vmatprep.subr.mxu0 0.0
          %534 = vmatpush1.msra.mxu0 %v508
          %535 = vmatprep.subr.mxu0 0.0
          %536 = vmatpush1.msra.mxu0 %v509
          %537 = vmatprep.subr.mxu0 0.0
          %538 = vmatpush1.msra.mxu0 %v510
          %539 = vmatprep.subr.mxu0 0.0
          %540 = vmatpush1.msra.mxu0 %v511
          %541 = vmatprep.subr.mxu0 0.0
          %542 = vmatpush1.msra.mxu0 %v512
          %543 = vmatprep.subr.mxu0 0.0
          %544 = vmatpush1.msra.mxu0 %v513
          %545 = vmatprep.subr.mxu0 0.0
          %546 = vmatpush1.msra.mxu0 %v514
          %547 = vmatprep.subr.mxu0 0.0
          %548 = vmatpush1.msra.mxu0 0.0
          %549 = vmatprep.subr.mxu0 0.0
          %550 = vmatpush1.msra.mxu0 0.0
          %551 = vmatprep.subr.mxu0 0.0
          %552 = vmatpush1.msra.mxu0 0.0
          %553 = vmatprep.subr.mxu0 0.0
          %554 = vmatpush1.msra.mxu0 0.0
          %555 = vmatprep.subr.mxu0 0.0
          %556 = vmatpush1.msra.mxu0 0.0
          %557 = vmatprep.subr.mxu0 0.0
          %558 = vmatpush1.msra.mxu0 0.0
          %559 = vmatprep.subr.mxu0 0.0
          %560 = vmatpush1.msra.mxu0 0.0
          %561 = vmatprep.subr.mxu0 0.0
          %562 = vmatpush1.msra.mxu0 0.0
          %563 = vmatprep.subr.mxu0 0.0
          %564 = vmatpush1.msra.mxu0 0.0
          %565 = vmatprep.subr.mxu0 0.0
          %566 = vmatpush1.msra.mxu0 0.0
          %567 = vmatprep.subr.mxu0 0.0
          %568 = vmatpush1.msra.mxu0 0.0
          %569 = vmatprep.subr.mxu0 0.0
          %570 = vmatpush1.msra.mxu0 0.0
          %571 = vmatprep.subr.mxu0 0.0
          %572 = vmatpush1.msra.mxu0 0.0
          %573 = vmatprep.subr.mxu0 0.0
          %574 = vmatpush1.msra.mxu0 0.0
          %575 = vmatprep.subr.mxu0 0.0
          %576 = vmatpush1.msra.mxu0 0.0
          %577 = vmatprep.subr.mxu0 0.0
          %578 = vmatpush1.msra.mxu0 0.0
          %579 = vmatprep.mubr.f32.mxu0 0.0
          %580 = vmatmul.mubr.f32.gmra.mrb[0].mxu0 %v498
          %v581 = vpop.f32.mrb[0].mxu0
          %v582 = vadd.f32 0.0, %v581
          %v583 = vpop.f32.mrb[0].mxu0
          %584 = vdwg.mxu0
          %v585 = vrcp.pop 256.0
          %v586 = vmul.f32 %v582, %v585
          %v587 = vlaneseq
          %v588 = vshrl.u32 %v587, 7
          %v589 = vsub.s32 0, %v588
          %v590 = vrot.slane %v586, %v589
          %v591 = vsub.f32 %v478, %v590
          %v592 = vsub.f32 %v479, %v590
          %v593 = vsub.f32 %v480, %v590
          %v594 = vsub.f32 %v481, %v590
          %v595 = vsub.f32 %v482, %v590
          %v596 = vsub.f32 %v483, %v590
          %v597 = vsub.f32 %v484, %v590
          %v598 = vsub.f32 %v485, %v590
          %v599 = vmul.f32 %v591, %v591
          %v600 = vmul.f32 %v592, %v592
          %v601 = vmul.f32 %v593, %v593
          %v602 = vmul.f32 %v594, %v594
          %v603 = vmul.f32 %v595, %v595
          %v604 = vmul.f32 %v596, %v596
          %v605 = vmul.f32 %v597, %v597
          %v606 = vmul.f32 %v598, %v598
          %v607 = vadd.f32 %v599, %v600
          %v608 = vadd.f32 %v607, %v601
          %v609 = vadd.f32 %v608, %v602
          %v610 = vadd.f32 %v609, %v603
          %v611 = vadd.f32 %v610, %v604
          %v612 = vadd.f32 %v611, %v605
          %v613 = vadd.f32 %v612, %v606
          %v614 = vrot.slane %v613, 4
          %v615 = vadd.f32 %v613, %v614
          %v616 = vrot.slane %v615, 2
          %v617 = vadd.f32 %v615, %v616
          %v618 = vrot.slane %v617, 1
          %v619 = vadd.f32 %v617, %v618
          %620 = vmatprep.subr.mxu0 0.0
          %621 = vmatpush1.msra.mxu0 %v499
          %622 = vmatprep.subr.mxu0 0.0
          %623 = vmatpush1.msra.mxu0 %v500
          %624 = vmatprep.subr.mxu0 0.0
          %625 = vmatpush1.msra.mxu0 %v501
          %626 = vmatprep.subr.mxu0 0.0
          %627 = vmatpush1.msra.mxu0 %v502
          %628 = vmatprep.subr.mxu0 0.0
          %629 = vmatpush1.msra.mxu0 %v503
          %630 = vmatprep.subr.mxu0 0.0
          %631 = vmatpush1.msra.mxu0 %v504
          %632 = vmatprep.subr.mxu0 0.0
          %633 = vmatpush1.msra.mxu0 %v505
          %634 = vmatprep.subr.mxu0 0.0
          %635 = vmatpush1.msra.mxu0 %v506
          %636 = vmatprep.subr.mxu0 0.0
          %637 = vmatpush1.msra.mxu0 %v507
          %638 = vmatprep.subr.mxu0 0.0
          %639 = vmatpush1.msra.mxu0 %v508
          %640 = vmatprep.subr.mxu0 0.0
          %641 = vmatpush1.msra.mxu0 %v509
          %642 = vmatprep.subr.mxu0 0.0
          %643 = vmatpush1.msra.mxu0 %v510
          %644 = vmatprep.subr.mxu0 0.0
          %645 = vmatpush1.msra.mxu0 %v511
          %646 = vmatprep.subr.mxu0 0.0
          %647 = vmatpush1.msra.mxu0 %v512
          %648 = vmatprep.subr.mxu0 0.0
          %649 = vmatpush1.msra.mxu0 %v513
          %650 = vmatprep.subr.mxu0 0.0
          %651 = vmatpush1.msra.mxu0 %v514
          %652 = vmatprep.subr.mxu0 0.0
          %653 = vmatpush1.msra.mxu0 0.0
          %654 = vmatprep.subr.mxu0 0.0
          %655 = vmatpush1.msra.mxu0 0.0
          %656 = vmatprep.subr.mxu0 0.0
          %657 = vmatpush1.msra.mxu0 0.0
          %658 = vmatprep.subr.mxu0 0.0
          %659 = vmatpush1.msra.mxu0 0.0
          %660 = vmatprep.subr.mxu0 0.0
          %661 = vmatpush1.msra.mxu0 0.0
          %662 = vmatprep.subr.mxu0 0.0
          %663 = vmatpush1.msra.mxu0 0.0
          %664 = vmatprep.subr.mxu0 0.0
          %665 = vmatpush1.msra.mxu0 0.0
          %666 = vmatprep.subr.mxu0 0.0
          %667 = vmatpush1.msra.mxu0 0.0
          %668 = vmatprep.subr.mxu0 0.0
          %669 = vmatpush1.msra.mxu0 0.0
          %670 = vmatprep.subr.mxu0 0.0
          %671 = vmatpush1.msra.mxu0 0.0
          %672 = vmatprep.subr.mxu0 0.0
          %673 = vmatpush1.msra.mxu0 0.0
          %674 = vmatprep.subr.mxu0 0.0
          %675 = vmatpush1.msra.mxu0 0.0
          %676 = vmatprep.subr.mxu0 0.0
          %677 = vmatpush1.msra.mxu0 0.0
          %678 = vmatprep.subr.mxu0 0.0
          %679 = vmatpush1.msra.mxu0 0.0
          %680 = vmatprep.subr.mxu0 0.0
          %681 = vmatpush1.msra.mxu0 0.0
          %682 = vmatprep.subr.mxu0 0.0
          %683 = vmatpush1.msra.mxu0 0.0
          %684 = vmatprep.mubr.f32.mxu0 0.0
          %685 = vmatmul.mubr.f32.gmra.mrb[0].mxu0 %v619
          %v686 = vpop.f32.mrb[0].mxu0
          %v687 = vadd.f32 0.0, %v686
          %v688 = vpop.f32.mrb[0].mxu0
          %689 = vdwg.mxu0
          %v690 = vmul.f32 %v687, %v585
          %v691 = vadd.f32 %v690, 1e-05
          %v692 = vrsqrt.pop %v691
          %v693 = vlaneseq
          %v694 = vshrl.u32 %v693, 7
          %v695 = vsub.s32 0, %v694
          %v696 = vrot.slane %v692, %v695
          %v697 = vmul.f32 %v591, %v696
          %v698 = vmul.f32 %v592, %v696
          %v699 = vmul.f32 %v593, %v696
          %v700 = vmul.f32 %v594, %v696
          %v701 = vmul.f32 %v595, %v696
          %v702 = vmul.f32 %v596, %v696
          %v703 = vmul.f32 %v597, %v696
          %v704 = vmul.f32 %v598, %v696
          %v705 = vld [vmem:[#allocation12] sm:$0x1]
          %v707 = vlaneseq
          %v708 = vshrl.u32 %v707, 7
          %v709 = vsub.s32 0, %v708
          %v710 = vrot.slane %v705, %v709
          %v712 = vmul.f32 %v697, %v710
          %v713 = vmul.f32 %v698, %v710
          %v714 = vmul.f32 %v699, %v710
          %v715 = vmul.f32 %v700, %v710
          %v716 = vmul.f32 %v701, %v710
          %v717 = vmul.f32 %v702, %v710
          %v718 = vmul.f32 %v703, %v710
          %v719 = vmul.f32 %v704, %v710
          %v720 = vld [vmem:[#allocation14] sm:$0x1]
          %v722 = vlaneseq
          %v723 = vshrl.u32 %v722, 7
          %v724 = vsub.s32 0, %v723
          %v725 = vrot.slane %v720, %v724
          %v727 = vadd.f32 %v712, %v725
          %v728 = vadd.f32 %v713, %v725
          %v729 = vadd.f32 %v714, %v725
          %v730 = vadd.f32 %v715, %v725
          %v731 = vadd.f32 %v716, %v725
          %v732 = vadd.f32 %v717, %v725
          %v733 = vadd.f32 %v718, %v725
          %v734 = vadd.f32 %v719, %v725
          %v735 = vpack.c.bf16 %v728, %v727
          %v736 = vpack.c.bf16 %v730, %v729
          %v737 = vpack.c.bf16 %v732, %v731
          %v738 = vpack.c.bf16 %v734, %v733
          %v739 = vld [vmem:[#allocation17] sm:$0xf]
          %v740 = vld [vmem:[#allocation17 + $0x4] sm:$0xf]
          %v741 = vld [vmem:[#allocation17 + $0x8] sm:$0xf]
          %v742 = vld [vmem:[#allocation17 + $0xc] sm:$0xf]
          %v743 = vld [vmem:[#allocation17 + $0x10] sm:$0xf]
          %v744 = vld [vmem:[#allocation17 + $0x14] sm:$0xf]
          %v745 = vld [vmem:[#allocation17 + $0x18] sm:$0xf]
          %v746 = vld [vmem:[#allocation17 + $0x1c] sm:$0xf]
          %v747 = vld [vmem:[#allocation17 + $0x20] sm:$0xf]
          %v748 = vld [vmem:[#allocation17 + $0x24] sm:$0xf]
          %v749 = vld [vmem:[#allocation17 + $0x28] sm:$0xf]
          %v750 = vld [vmem:[#allocation17 + $0x2c] sm:$0xf]
          %v751 = vld [vmem:[#allocation17 + $0x30] sm:$0xf]
          %v752 = vld [vmem:[#allocation17 + $0x34] sm:$0xf]
          %v753 = vld [vmem:[#allocation17 + $0x38] sm:$0xf]
          %v754 = vld [vmem:[#allocation17 + $0x3c] sm:$0xf]
          %v771 = vunpack.c.l.b16 %v739
          %v772 = vunpack.c.l.b16 %v740
          %v773 = vunpack.c.l.b16 %v741
          %v774 = vunpack.c.l.b16 %v742
          %v775 = vunpack.c.l.b16 %v743
          %v776 = vunpack.c.l.b16 %v744
          %v777 = vunpack.c.l.b16 %v745
          %v778 = vunpack.c.l.b16 %v746
          %v779 = vunpack.c.l.b16 %v747
          %v780 = vunpack.c.l.b16 %v748
          %v781 = vunpack.c.l.b16 %v749
          %v782 = vunpack.c.l.b16 %v750
          %v783 = vunpack.c.l.b16 %v751
          %v784 = vunpack.c.l.b16 %v752
          %v785 = vunpack.c.l.b16 %v753
          %v786 = vunpack.c.l.b16 %v754
          %v787 = vpack.c.b16 %v772, %v771
          %v788 = vpack.c.b16 %v774, %v773
          %v789 = vpack.c.b16 %v776, %v775
          %v790 = vpack.c.b16 %v778, %v777
          %v791 = vpack.c.b16 %v780, %v779
          %v792 = vpack.c.b16 %v782, %v781
          %v793 = vpack.c.b16 %v784, %v783
          %v794 = vpack.c.b16 %v786, %v785
          %803 = vmatprep.subr.bf16.mxu0 0
          %804 = vmatpush1.bf16.msra.mxu0 %v787
          %805 = vmatprep.subr.bf16.mxu0 0
          %806 = vmatpush1.bf16.msra.mxu0 %v788
          %807 = vmatprep.subr.bf16.mxu0 0
          %808 = vmatpush1.bf16.msra.mxu0 %v789
          %809 = vmatprep.subr.bf16.mxu0 0
          %810 = vmatpush1.bf16.msra.mxu0 %v790
          %811 = vmatprep.subr.bf16.mxu0 0
          %812 = vmatpush1.bf16.msra.mxu0 %v791
          %813 = vmatprep.subr.bf16.mxu0 0
          %814 = vmatpush1.bf16.msra.mxu0 %v792
          %815 = vmatprep.subr.bf16.mxu0 0
          %816 = vmatpush1.bf16.msra.mxu0 %v793
          %817 = vmatprep.subr.bf16.mxu0 0
          %818 = vmatpush1.bf16.msra.mxu0 %v794
          %819 = vmatprep.subr.bf16.mxu0 0
          %820 = vmatpush1.bf16.msra.mxu0 0
          %821 = vmatprep.subr.bf16.mxu0 0
          %822 = vmatpush1.bf16.msra.mxu0 0
          %823 = vmatprep.subr.bf16.mxu0 0
          %824 = vmatpush1.bf16.msra.mxu0 0
          %825 = vmatprep.subr.bf16.mxu0 0
          %826 = vmatpush1.bf16.msra.mxu0 0
          %827 = vmatprep.subr.bf16.mxu0 0
          %828 = vmatpush1.bf16.msra.mxu0 0
          %829 = vmatprep.subr.bf16.mxu0 0
          %830 = vmatpush1.bf16.msra.mxu0 0
          %831 = vmatprep.subr.bf16.mxu0 0
          %832 = vmatpush1.bf16.msra.mxu0 0
          %833 = vmatprep.subr.bf16.mxu0 0
          %834 = vmatpush1.bf16.msra.mxu0 0
          %835 = vmatprep.mubr.bf16.mxu0 0
          %836 = vmatmul.mubr.bf16.gmra.mrb[0].mxu0 %v735
          %v837 = vpop.f32.mrb[0].mxu0
          %v838 = vadd.f32 0.0, %v837
          %v839 = vpop.f32.mrb[0].mxu0
          %v840 = vpop.f32.mrb[0].mxu0
          %v841 = vadd.f32 0.0, %v840
          %v842 = vpop.f32.mrb[0].mxu0
          %843 = vmatprep.mubr.bf16.mxu0 0
          %844 = vmatmul.mubr.bf16.gmra.mrb[0].mxu0 %v736
          %v845 = vpop.f32.mrb[0].mxu0
          %v846 = vadd.f32 0.0, %v845
          %v847 = vpop.f32.mrb[0].mxu0
          %v848 = vpop.f32.mrb[0].mxu0
          %v849 = vadd.f32 0.0, %v848
          %v850 = vpop.f32.mrb[0].mxu0
          %851 = vmatprep.mubr.bf16.mxu0 0
          %852 = vmatmul.mubr.bf16.gmra.mrb[0].mxu0 %v737
          %v853 = vpop.f32.mrb[0].mxu0
          %v854 = vadd.f32 0.0, %v853
          %v855 = vpop.f32.mrb[0].mxu0
          %v856 = vpop.f32.mrb[0].mxu0
          %v857 = vadd.f32 0.0, %v856
          %v858 = vpop.f32.mrb[0].mxu0
          %859 = vmatprep.mubr.bf16.mxu0 0
          %860 = vmatmul.mubr.bf16.gmra.mrb[0].mxu0 %v738
          %v861 = vpop.f32.mrb[0].mxu0
          %v862 = vadd.f32 0.0, %v861
          %v863 = vpop.f32.mrb[0].mxu0
          %v864 = vpop.f32.mrb[0].mxu0
          %v865 = vadd.f32 0.0, %v864
          %v866 = vpop.f32.mrb[0].mxu0
          %867 = vdwg.mxu0
          %v868 = vld [vmem:[#allocation18] sm:$0xf]
          %v869 = vld [vmem:[#allocation18 + $0x4] sm:$0xf]
          %v870 = vld [vmem:[#allocation18 + $0x8] sm:$0xf]
          %v871 = vld [vmem:[#allocation18 + $0xc] sm:$0xf]
          %v872 = vld [vmem:[#allocation18 + $0x10] sm:$0xf]
          %v873 = vld [vmem:[#allocation18 + $0x14] sm:$0xf]
          %v874 = vld [vmem:[#allocation18 + $0x18] sm:$0xf]
          %v875 = vld [vmem:[#allocation18 + $0x1c] sm:$0xf]
          %v876 = vld [vmem:[#allocation18 + $0x20] sm:$0xf]
          %v877 = vld [vmem:[#allocation18 + $0x24] sm:$0xf]
          %v878 = vld [vmem:[#allocation18 + $0x28] sm:$0xf]
          %v879 = vld [vmem:[#allocation18 + $0x2c] sm:$0xf]
          %v880 = vld [vmem:[#allocation18 + $0x30] sm:$0xf]
          %v881 = vld [vmem:[#allocation18 + $0x34] sm:$0xf]
          %v882 = vld [vmem:[#allocation18 + $0x38] sm:$0xf]
          %v883 = vld [vmem:[#allocation18 + $0x3c] sm:$0xf]
          %v900 = vunpack.c.l.b16 %v868
          %v901 = vunpack.c.l.b16 %v869
          %v902 = vunpack.c.l.b16 %v870
          %v903 = vunpack.c.l.b16 %v871
          %v904 = vunpack.c.l.b16 %v872
          %v905 = vunpack.c.l.b16 %v873
          %v906 = vunpack.c.l.b16 %v874
          %v907 = vunpack.c.l.b16 %v875
          %v908 = vunpack.c.l.b16 %v876
          %v909 = vunpack.c.l.b16 %v877
          %v910 = vunpack.c.l.b16 %v878
          %v911 = vunpack.c.l.b16 %v879
          %v912 = vunpack.c.l.b16 %v880
          %v913 = vunpack.c.l.b16 %v881
          %v914 = vunpack.c.l.b16 %v882
          %v915 = vunpack.c.l.b16 %v883
          %v916 = vpack.c.b16 %v901, %v900
          %v917 = vpack.c.b16 %v903, %v902
          %v918 = vpack.c.b16 %v905, %v904
          %v919 = vpack.c.b16 %v907, %v906
          %v920 = vpack.c.b16 %v909, %v908
          %v921 = vpack.c.b16 %v911, %v910
          %v922 = vpack.c.b16 %v913, %v912
          %v923 = vpack.c.b16 %v915, %v914
          %932 = vmatprep.subr.bf16.mxu0 0
          %933 = vmatpush1.bf16.msra.mxu0 %v916
          %934 = vmatprep.subr.bf16.mxu0 0
          %935 = vmatpush1.bf16.msra.mxu0 %v917
          %936 = vmatprep.subr.bf16.mxu0 0
          %937 = vmatpush1.bf16.msra.mxu0 %v918
          %938 = vmatprep.subr.bf16.mxu0 0
          %939 = vmatpush1.bf16.msra.mxu0 %v919
          %940 = vmatprep.subr.bf16.mxu0 0
          %941 = vmatpush1.bf16.msra.mxu0 %v920
          %942 = vmatprep.subr.bf16.mxu0 0
          %943 = vmatpush1.bf16.msra.mxu0 %v921
          %944 = vmatprep.subr.bf16.mxu0 0
          %945 = vmatpush1.bf16.msra.mxu0 %v922
          %946 = vmatprep.subr.bf16.mxu0 0
          %947 = vmatpush1.bf16.msra.mxu0 %v923
          %948 = vmatprep.subr.bf16.mxu0 0
          %949 = vmatpush1.bf16.msra.mxu0 0
          %950 = vmatprep.subr.bf16.mxu0 0
          %951 = vmatpush1.bf16.msra.mxu0 0
          %952 = vmatprep.subr.bf16.mxu0 0
          %953 = vmatpush1.bf16.msra.mxu0 0
          %954 = vmatprep.subr.bf16.mxu0 0
          %955 = vmatpush1.bf16.msra.mxu0 0
          %956 = vmatprep.subr.bf16.mxu0 0
          %957 = vmatpush1.bf16.msra.mxu0 0
          %958 = vmatprep.subr.bf16.mxu0 0
          %959 = vmatpush1.bf16.msra.mxu0 0
          %960 = vmatprep.subr.bf16.mxu0 0
          %961 = vmatpush1.bf16.msra.mxu0 0
          %962 = vmatprep.subr.bf16.mxu0 0
          %963 = vmatpush1.bf16.msra.mxu0 0
          %964 = vmatprep.mubr.bf16.mxu0 0
          %965 = vmatmul.mubr.bf16.gmra.mrb[0].mxu0 %v735
          %v966 = vpop.f32.mrb[0].mxu0
          %v967 = vadd.f32 0.0, %v966
          %v968 = vpop.f32.mrb[0].mxu0
          %v969 = vpop.f32.mrb[0].mxu0
          %v970 = vadd.f32 0.0, %v969
          %v971 = vpop.f32.mrb[0].mxu0
          %972 = vmatprep.mubr.bf16.mxu0 0
          %973 = vmatmul.mubr.bf16.gmra.mrb[0].mxu0 %v736
          %v974 = vpop.f32.mrb[0].mxu0
          %v975 = vadd.f32 0.0, %v974
          %v976 = vpop.f32.mrb[0].mxu0
          %v977 = vpop.f32.mrb[0].mxu0
          %v978 = vadd.f32 0.0, %v977
          %v979 = vpop.f32.mrb[0].mxu0
          %980 = vmatprep.mubr.bf16.mxu0 0
          %981 = vmatmul.mubr.bf16.gmra.mrb[0].mxu0 %v737
          %v982 = vpop.f32.mrb[0].mxu0
          %v983 = vadd.f32 0.0, %v982
          %v984 = vpop.f32.mrb[0].mxu0
          %v985 = vpop.f32.mrb[0].mxu0
          %v986 = vadd.f32 0.0, %v985
          %v987 = vpop.f32.mrb[0].mxu0
          %988 = vmatprep.mubr.bf16.mxu0 0
          %989 = vmatmul.mubr.bf16.gmra.mrb[0].mxu0 %v738
          %v990 = vpop.f32.mrb[0].mxu0
          %v991 = vadd.f32 0.0, %v990
          %v992 = vpop.f32.mrb[0].mxu0
          %v993 = vpop.f32.mrb[0].mxu0
          %v994 = vadd.f32 0.0, %v993
          %v995 = vpop.f32.mrb[0].mxu0
          %996 = vdwg.mxu0
          %v997 = vld [vmem:[#allocation20] sm:$0xf]
          %v998 = vld [vmem:[#allocation20 + $0x4] sm:$0xf]
          %v999 = vld [vmem:[#allocation20 + $0x8] sm:$0xf]
          %v1000 = vld [vmem:[#allocation20 + $0xc] sm:$0xf]
          %v1001 = vld [vmem:[#allocation20 + $0x10] sm:$0xf]
          %v1002 = vld [vmem:[#allocation20 + $0x14] sm:$0xf]
          %v1003 = vld [vmem:[#allocation20 + $0x18] sm:$0xf]
          %v1004 = vld [vmem:[#allocation20 + $0x1c] sm:$0xf]
          %v1005 = vld [vmem:[#allocation20 + $0x20] sm:$0xf]
          %v1006 = vld [vmem:[#allocation20 + $0x24] sm:$0xf]
          %v1007 = vld [vmem:[#allocation20 + $0x28] sm:$0xf]
          %v1008 = vld [vmem:[#allocation20 + $0x2c] sm:$0xf]
          %v1009 = vld [vmem:[#allocation20 + $0x30] sm:$0xf]
          %v1010 = vld [vmem:[#allocation20 + $0x34] sm:$0xf]
          %v1011 = vld [vmem:[#allocation20 + $0x38] sm:$0xf]
          %v1012 = vld [vmem:[#allocation20 + $0x3c] sm:$0xf]
          %v1029 = vunpack.c.l.b16 %v997
          %v1030 = vunpack.c.l.b16 %v998
          %v1031 = vunpack.c.l.b16 %v999
          %v1032 = vunpack.c.l.b16 %v1000
          %v1033 = vunpack.c.l.b16 %v1001
          %v1034 = vunpack.c.l.b16 %v1002
          %v1035 = vunpack.c.l.b16 %v1003
          %v1036 = vunpack.c.l.b16 %v1004
          %v1037 = vunpack.c.l.b16 %v1005
          %v1038 = vunpack.c.l.b16 %v1006
          %v1039 = vunpack.c.l.b16 %v1007
          %v1040 = vunpack.c.l.b16 %v1008
          %v1041 = vunpack.c.l.b16 %v1009
          %v1042 = vunpack.c.l.b16 %v1010
          %v1043 = vunpack.c.l.b16 %v1011
          %v1044 = vunpack.c.l.b16 %v1012
          %v1045 = vpack.c.b16 %v1030, %v1029
          %v1046 = vpack.c.b16 %v1032, %v1031
          %v1047 = vpack.c.b16 %v1034, %v1033
          %v1048 = vpack.c.b16 %v1036, %v1035
          %v1049 = vpack.c.b16 %v1038, %v1037
          %v1050 = vpack.c.b16 %v1040, %v1039
          %v1051 = vpack.c.b16 %v1042, %v1041
          %v1052 = vpack.c.b16 %v1044, %v1043
          %1061 = vmatprep.subr.bf16.mxu0 0
          %1062 = vmatpush1.bf16.msra.mxu0 %v1045
          %1063 = vmatprep.subr.bf16.mxu0 0
          %1064 = vmatpush1.bf16.msra.mxu0 %v1046
          %1065 = vmatprep.subr.bf16.mxu0 0
          %1066 = vmatpush1.bf16.msra.mxu0 %v1047
          %1067 = vmatprep.subr.bf16.mxu0 0
          %1068 = vmatpush1.bf16.msra.mxu0 %v1048
          %1069 = vmatprep.subr.bf16.mxu0 0
          %1070 = vmatpush1.bf16.msra.mxu0 %v1049
          %1071 = vmatprep.subr.bf16.mxu0 0
          %1072 = vmatpush1.bf16.msra.mxu0 %v1050
          %1073 = vmatprep.subr.bf16.mxu0 0
          %1074 = vmatpush1.bf16.msra.mxu0 %v1051
          %1075 = vmatprep.subr.bf16.mxu0 0
          %1076 = vmatpush1.bf16.msra.mxu0 %v1052
          %1077 = vmatprep.subr.bf16.mxu0 0
          %1078 = vmatpush1.bf16.msra.mxu0 0
          %1079 = vmatprep.subr.bf16.mxu0 0
          %1080 = vmatpush1.bf16.msra.mxu0 0
          %1081 = vmatprep.subr.bf16.mxu0 0
          %1082 = vmatpush1.bf16.msra.mxu0 0
          %1083 = vmatprep.subr.bf16.mxu0 0
          %1084 = vmatpush1.bf16.msra.mxu0 0
          %1085 = vmatprep.subr.bf16.mxu0 0
          %1086 = vmatpush1.bf16.msra.mxu0 0
          %1087 = vmatprep.subr.bf16.mxu0 0
          %1088 = vmatpush1.bf16.msra.mxu0 0
          %1089 = vmatprep.subr.bf16.mxu0 0
          %1090 = vmatpush1.bf16.msra.mxu0 0
          %1091 = vmatprep.subr.bf16.mxu0 0
          %1092 = vmatpush1.bf16.msra.mxu0 0
          %1093 = vmatprep.mubr.bf16.mxu0 0
          %1094 = vmatmul.mubr.bf16.gmra.mrb[0].mxu0 %v735
          %v1095 = vpop.f32.mrb[0].mxu0
          %v1096 = vadd.f32 0.0, %v1095
          %v1097 = vpop.f32.mrb[0].mxu0
          %v1098 = vpop.f32.mrb[0].mxu0
          %v1099 = vadd.f32 0.0, %v1098
          %v1100 = vpop.f32.mrb[0].mxu0
          %1101 = vmatprep.mubr.bf16.mxu0 0
          %1102 = vmatmul.mubr.bf16.gmra.mrb[0].mxu0 %v736
          %v1103 = vpop.f32.mrb[0].mxu0
          %v1104 = vadd.f32 0.0, %v1103
          %v1105 = vpop.f32.mrb[0].mxu0
          %v1106 = vpop.f32.mrb[0].mxu0
          %v1107 = vadd.f32 0.0, %v1106
          %v1108 = vpop.f32.mrb[0].mxu0
          %1109 = vmatprep.mubr.bf16.mxu0 0
          %1110 = vmatmul.mubr.bf16.gmra.mrb[0].mxu0 %v737
          %v1111 = vpop.f32.mrb[0].mxu0
          %v1112 = vadd.f32 0.0, %v1111
          %v1113 = vpop.f32.mrb[0].mxu0
          %v1114 = vpop.f32.mrb[0].mxu0
          %v1115 = vadd.f32 0.0, %v1114
          %v1116 = vpop.f32.mrb[0].mxu0
          %1117 = vmatprep.mubr.bf16.mxu0 0
          %1118 = vmatmul.mubr.bf16.gmra.mrb[0].mxu0 %v738
          %v1119 = vpop.f32.mrb[0].mxu0
          %v1120 = vadd.f32 0.0, %v1119
          %v1121 = vpop.f32.mrb[0].mxu0
          %v1122 = vpop.f32.mrb[0].mxu0
          %v1123 = vadd.f32 0.0, %v1122
          %v1124 = vpop.f32.mrb[0].mxu0
          %1125 = vdwg.mxu0
          %v1126 = vpack.c.bf16 %v841, %v838
          %v1127 = vpack.c.bf16 %v849, %v846
          %v1128 = vpack.c.bf16 %v857, %v854
          %v1129 = vpack.c.bf16 %v865, %v862
          %vm1130 = vcmask 130048
          %1131 = vst.msk [vmem:[#allocation2] sm:$0xff] %vm1130, %v1126
          %1132 = vst.msk [vmem:[#allocation2 + $0x8] sm:$0xff] %vm1130, %v1127
          %1133 = vst.msk [vmem:[#allocation2 + $0x10] sm:$0xff] %vm1130, %v1128
          %1134 = vst.msk [vmem:[#allocation2 + $0x18] sm:$0xff] %vm1130, %v1129
          %v1135 = vpack.c.bf16 %v970, %v967
          %v1136 = vpack.c.bf16 %v978, %v975
          %v1137 = vpack.c.bf16 %v986, %v983
          %v1138 = vpack.c.bf16 %v994, %v991
          %1139 = vst.msk [vmem:[#allocation3] sm:$0xff] %vm1130, %v1135
          %1140 = vst.msk [vmem:[#allocation3 + $0x8] sm:$0xff] %vm1130, %v1136
          %1141 = vst.msk [vmem:[#allocation3 + $0x10] sm:$0xff] %vm1130, %v1137
          %1142 = vst.msk [vmem:[#allocation3 + $0x18] sm:$0xff] %vm1130, %v1138
          %v1143 = vpack.c.bf16 %v1099, %v1096
          %v1144 = vpack.c.bf16 %v1107, %v1104
          %v1145 = vpack.c.bf16 %v1115, %v1112
          %v1146 = vpack.c.bf16 %v1123, %v1120
          %1147 = vst.msk [vmem:[#allocation4] sm:$0xff] %vm1130, %v1143
          %1148 = vst.msk [vmem:[#allocation4 + $0x8] sm:$0xff] %vm1130, %v1144
          %1149 = vst.msk [vmem:[#allocation4 + $0x10] sm:$0xff] %vm1130, %v1145
          %1150 = vst.msk [vmem:[#allocation4 + $0x18] sm:$0xff] %vm1130, %v1146
          %1155 = vrot.lane.b32.xlu0 %v1126, 112
          %v1156 = vpop.permute.xlu0 %1155
          %1157 = vrot.lane.b32.xlu0 %v1127, 112
          %v1158 = vpop.permute.xlu0 %1157
          %1159 = vrot.lane.b32.xlu0 %v1128, 112
          %v1160 = vpop.permute.xlu0 %1159
          %1161 = vrot.lane.b32.xlu0 %v1129, 112
          %v1162 = vpop.permute.xlu0 %1161
          %s1167 = scalar_lea.vmem [#allocation2], 32
          %1168 = vst.msk [vmem:[%s1167] sm:$0xff] %vm1130, %v1156
          %1169 = vst.msk [vmem:[%s1167 + $0x8] sm:$0xff] %vm1130, %v1158
          %1170 = vst.msk [vmem:[%s1167 + $0x10] sm:$0xff] %vm1130, %v1160
          %1171 = vst.msk [vmem:[%s1167 + $0x18] sm:$0xff] %vm1130, %v1162
          %1176 = vrot.lane.b32.xlu0 %v1135, 112
          %v1177 = vpop.permute.xlu0 %1176
          %1178 = vrot.lane.b32.xlu0 %v1136, 112
          %v1179 = vpop.permute.xlu0 %1178
          %1180 = vrot.lane.b32.xlu0 %v1137, 112
          %v1181 = vpop.permute.xlu0 %1180
          %1182 = vrot.lane.b32.xlu0 %v1138, 112
          %v1183 = vpop.permute.xlu0 %1182
          %s1188 = scalar_lea.vmem [#allocation3], 32
          %1189 = vst.msk [vmem:[%s1188] sm:$0xff] %vm1130, %v1177
          %1190 = vst.msk [vmem:[%s1188 + $0x8] sm:$0xff] %vm1130, %v1179
          %1191 = vst.msk [vmem:[%s1188 + $0x10] sm:$0xff] %vm1130, %v1181
          %1192 = vst.msk [vmem:[%s1188 + $0x18] sm:$0xff] %vm1130, %v1183
          %1197 = vrot.lane.b32.xlu0 %v1143, 112
          %v1198 = vpop.permute.xlu0 %1197
          %1199 = vrot.lane.b32.xlu0 %v1144, 112
          %v1200 = vpop.permute.xlu0 %1199
          %1201 = vrot.lane.b32.xlu0 %v1145, 112
          %v1202 = vpop.permute.xlu0 %1201
          %1203 = vrot.lane.b32.xlu0 %v1146, 112
          %v1204 = vpop.permute.xlu0 %1203
          %s1209 = scalar_lea.vmem [#allocation4], 32
          %1210 = vst.msk [vmem:[%s1209] sm:$0xff] %vm1130, %v1198
          %1211 = vst.msk [vmem:[%s1209 + $0x8] sm:$0xff] %vm1130, %v1200
          %1212 = vst.msk [vmem:[%s1209 + $0x10] sm:$0xff] %vm1130, %v1202
          %1213 = vst.msk [vmem:[%s1209 + $0x18] sm:$0xff] %vm1130, %v1204
          %vm1214 = vcmask 7168
          %1215 = vst.msk [vmem:[#allocation5] sm:$0xff] %vm1214, -inf
          %1216 = vst.msk [vmem:[#allocation5 + $0x8] sm:$0xff] %vm1214, -inf
          %1217 = vst.msk [vmem:[#allocation5 + $0x10] sm:$0xff] %vm1214, -inf
          %1218 = vst.msk [vmem:[#allocation5 + $0x18] sm:$0xff] %vm1214, -inf
          %1219 = vst.msk [vmem:[#allocation5 + $0x20] sm:$0xff] %vm1214, -inf
          %1220 = vst.msk [vmem:[#allocation5 + $0x28] sm:$0xff] %vm1214, -inf
          %1221 = vst.msk [vmem:[#allocation5 + $0x30] sm:$0xff] %vm1214, -inf
          %1222 = vst.msk [vmem:[#allocation5 + $0x38] sm:$0xff] %vm1214, -inf
          %1223 = vst.msk [vmem:[#allocation5 + $0x40] sm:$0xff] %vm1214, -inf
          %1224 = vst.msk [vmem:[#allocation5 + $0x48] sm:$0xff] %vm1214, -inf
          %1225 = vst.msk [vmem:[#allocation5 + $0x50] sm:$0xff] %vm1214, -inf
          %1226 = vst.msk [vmem:[#allocation5 + $0x58] sm:$0xff] %vm1214, -inf
          %1227 = vst.msk [vmem:[#allocation5 + $0x60] sm:$0xff] %vm1214, -inf
          %1228 = vst.msk [vmem:[#allocation5 + $0x68] sm:$0xff] %vm1214, -inf
          %1229 = vst.msk [vmem:[#allocation5 + $0x70] sm:$0xff] %vm1214, -inf
          %1230 = vst.msk [vmem:[#allocation5 + $0x78] sm:$0xff] %vm1214, -inf
          %1231 = vst.msk [vmem:[#allocation6] sm:$0xff] %vm1214, 0.0
          %1232 = vst.msk [vmem:[#allocation6 + $0x8] sm:$0xff] %vm1214, 0.0
          %1233 = vst.msk [vmem:[#allocation6 + $0x10] sm:$0xff] %vm1214, 0.0
          %1234 = vst.msk [vmem:[#allocation6 + $0x18] sm:$0xff] %vm1214, 0.0
          %1235 = vst.msk [vmem:[#allocation6 + $0x20] sm:$0xff] %vm1214, 0.0
          %1236 = vst.msk [vmem:[#allocation6 + $0x28] sm:$0xff] %vm1214, 0.0
          %1237 = vst.msk [vmem:[#allocation6 + $0x30] sm:$0xff] %vm1214, 0.0
          %1238 = vst.msk [vmem:[#allocation6 + $0x38] sm:$0xff] %vm1214, 0.0
          %1239 = vst.msk [vmem:[#allocation6 + $0x40] sm:$0xff] %vm1214, 0.0
          %1240 = vst.msk [vmem:[#allocation6 + $0x48] sm:$0xff] %vm1214, 0.0
          %1241 = vst.msk [vmem:[#allocation6 + $0x50] sm:$0xff] %vm1214, 0.0
          %1242 = vst.msk [vmem:[#allocation6 + $0x58] sm:$0xff] %vm1214, 0.0
          %1243 = vst.msk [vmem:[#allocation6 + $0x60] sm:$0xff] %vm1214, 0.0
          %1244 = vst.msk [vmem:[#allocation6 + $0x68] sm:$0xff] %vm1214, 0.0
          %1245 = vst.msk [vmem:[#allocation6 + $0x70] sm:$0xff] %vm1214, 0.0
          %1246 = vst.msk [vmem:[#allocation6 + $0x78] sm:$0xff] %vm1214, 0.0
          %1247 = vst.msk [vmem:[#allocation7] sm:$0xff] %vm1130, 0.0
          %1248 = vst.msk [vmem:[#allocation7 + $0x8] sm:$0xff] %vm1130, 0.0
          %1249 = vst.msk [vmem:[#allocation7 + $0x10] sm:$0xff] %vm1130, 0.0
          %1250 = vst.msk [vmem:[#allocation7 + $0x18] sm:$0xff] %vm1130, 0.0
          %1251 = vst.msk [vmem:[#allocation7 + $0x20] sm:$0xff] %vm1130, 0.0
          %1252 = vst.msk [vmem:[#allocation7 + $0x28] sm:$0xff] %vm1130, 0.0
          %1253 = vst.msk [vmem:[#allocation7 + $0x30] sm:$0xff] %vm1130, 0.0
          %1254 = vst.msk [vmem:[#allocation7 + $0x38] sm:$0xff] %vm1130, 0.0
          %1255 = vst.msk [vmem:[#allocation7 + $0x40] sm:$0xff] %vm1130, 0.0
          %1256 = vst.msk [vmem:[#allocation7 + $0x48] sm:$0xff] %vm1130, 0.0
          %1257 = vst.msk [vmem:[#allocation7 + $0x50] sm:$0xff] %vm1130, 0.0
          %1258 = vst.msk [vmem:[#allocation7 + $0x58] sm:$0xff] %vm1130, 0.0
          %1259 = vst.msk [vmem:[#allocation7 + $0x60] sm:$0xff] %vm1130, 0.0
          %1260 = vst.msk [vmem:[#allocation7 + $0x68] sm:$0xff] %vm1130, 0.0
          %1261 = vst.msk [vmem:[#allocation7 + $0x70] sm:$0xff] %vm1130, 0.0
          %1262 = vst.msk [vmem:[#allocation7 + $0x78] sm:$0xff] %vm1130, 0.0
          %1263 = vst [vmem:[#allocation8] sm:$0xff] 0
          %1264 = vst [vmem:[#allocation8 + $0x8] sm:$0xff] 0
          %1265 = vst [vmem:[#allocation8 + $0x10] sm:$0xff] 0
          %1266 = vst [vmem:[#allocation8 + $0x18] sm:$0xff] 0
        $region96: #{tpu_custom_call.1} parent=55 // pred_fallthru
          _
        %s1267 = smul.u32 %s35, 64
        %s1268 = sshra.s32 %s1267, 4
        %s1269 = sand.u32 %s1267, 15
        %s1270 = smul.addr %s1268, 8
        %s1271 = scalar_lea.vmem [#allocation3], %s1270
        %v1272 = vld [vmem:[%s1271] sm:$0xff]
        %v1273 = vld [vmem:[%s1271 + $0x8] sm:$0xff]
        %v1274 = vld [vmem:[%s1271 + $0x10] sm:$0xff]
        %v1275 = vld [vmem:[%s1271 + $0x18] sm:$0xff]
        %v1276 = vld [vmem:[%s1271 + $0x20] sm:$0xff]
        %v1277 = vld [vmem:[%s1271 + $0x28] sm:$0xff]
        %v1278 = vld [vmem:[%s1271 + $0x30] sm:$0xff]
        %v1279 = vld [vmem:[%s1271 + $0x38] sm:$0xff]
        %s1280 = smul.addr %s1268, 8
        %s1281 = scalar_lea.vmem [#allocation4], %s1280
        %v1282 = vld [vmem:[%s1281] sm:$0xff]
        %v1283 = vld [vmem:[%s1281 + $0x8] sm:$0xff]
        %v1284 = vld [vmem:[%s1281 + $0x10] sm:$0xff]
        %v1285 = vld [vmem:[%s1281 + $0x18] sm:$0xff]
        %v1286 = vld [vmem:[%s1281 + $0x20] sm:$0xff]
        %v1287 = vld [vmem:[%s1281 + $0x28] sm:$0xff]
        %v1288 = vld [vmem:[%s1281 + $0x30] sm:$0xff]
        %v1289 = vld [vmem:[%s1281 + $0x38] sm:$0xff]
        %v1290 = vld [vmem:[#allocation2] sm:$0xff]
        %v1291 = vld [vmem:[#allocation2 + $0x8] sm:$0xff]
        %v1292 = vld [vmem:[#allocation2 + $0x10] sm:$0xff]
        %v1293 = vld [vmem:[#allocation2 + $0x18] sm:$0xff]
        %v1294 = vld [vmem:[#allocation2 + $0x20] sm:$0xff]
        %v1295 = vld [vmem:[#allocation2 + $0x28] sm:$0xff]
        %v1296 = vld [vmem:[#allocation2 + $0x30] sm:$0xff]
        %v1297 = vld [vmem:[#allocation2 + $0x38] sm:$0xff]
        %vm1298 = vcmask 130048
        %v1300 = vsel %vm1298, %v1290, 0
        %v1303 = vsel %vm1298, %v1291, 0
        %v1306 = vsel %vm1298, %v1292, 0
        %v1309 = vsel %vm1298, %v1293, 0
        %v1312 = vsel %vm1298, %v1272, 0
        %v1315 = vsel %vm1298, %v1273, 0
        %v1318 = vsel %vm1298, %v1274, 0
        %v1321 = vsel %vm1298, %v1275, 0
        %1323 = vmatprep.subr.bf16.mxu0 0
        %1324 = vmatpush1.bf16.xpose.msra.mxu0 %v1312
        %1325 = vmatprep.subr.bf16.mxu0 0
        %1326 = vmatpush1.bf16.xpose.msra.mxu0 %v1315
        %1327 = vmatprep.subr.bf16.mxu0 0
        %1328 = vmatpush1.bf16.xpose.msra.mxu0 %v1318
        %1329 = vmatprep.subr.bf16.mxu0 0
        %1330 = vmatpush1.bf16.xpose.msra.mxu0 %v1321
        %1331 = vmatprep.subr.bf16.mxu0 0
        %1332 = vmatpush1.bf16.xpose.msra.mxu0 0
        %1333 = vmatprep.subr.bf16.mxu0 0
        %1334 = vmatpush1.bf16.xpose.msra.mxu0 0
        %1335 = vmatprep.subr.bf16.mxu0 0
        %1336 = vmatpush1.bf16.xpose.msra.mxu0 0
        %1337 = vmatprep.subr.bf16.mxu0 0
        %1338 = vmatpush1.bf16.xpose.msra.mxu0 0
        %1339 = vmatprep.subr.bf16.mxu0 0
        %1340 = vmatpush1.bf16.xpose.msra.mxu0 0
        %1341 = vmatprep.subr.bf16.mxu0 0
        %1342 = vmatpush1.bf16.xpose.msra.mxu0 0
        %1343 = vmatprep.subr.bf16.mxu0 0
        %1344 = vmatpush1.bf16.xpose.msra.mxu0 0
        %1345 = vmatprep.subr.bf16.mxu0 0
        %1346 = vmatpush1.bf16.xpose.msra.mxu0 0
        %1347 = vmatprep.subr.bf16.mxu0 0
        %1348 = vmatpush1.bf16.xpose.msra.mxu0 0
        %1349 = vmatprep.subr.bf16.mxu0 0
        %1350 = vmatpush1.bf16.xpose.msra.mxu0 0
        %1351 = vmatprep.subr.bf16.mxu0 0
        %1352 = vmatpush1.bf16.xpose.msra.mxu0 0
        %1353 = vmatprep.subr.bf16.mxu0 0
        %1354 = vmatpush1.bf16.xpose.msra.mxu0 0
        %1355 = vmatprep.mubr.bf16.mxu0 0
        %1356 = vmatmul.mubr.bf16.gmra.mrb[0].mxu0 %v1300
        %v1357 = vpop.f32.mrb[0].mxu0
        %v1358 = vadd.f32 0.0, %v1357
        %v1359 = vpop.f32.mrb[0].mxu0
        %v1360 = vpop.f32.mrb[0].mxu0
        %v1361 = vadd.f32 0.0, %v1360
        %v1362 = vpop.f32.mrb[0].mxu0
        %1363 = vmatprep.mubr.bf16.mxu0 0
        %1364 = vmatmul.mubr.bf16.gmra.mrb[0].mxu0 %v1303
        %v1365 = vpop.f32.mrb[0].mxu0
        %v1366 = vadd.f32 0.0, %v1365
        %v1367 = vpop.f32.mrb[0].mxu0
        %v1368 = vpop.f32.mrb[0].mxu0
        %v1369 = vadd.f32 0.0, %v1368
        %v1370 = vpop.f32.mrb[0].mxu0
        %1371 = vmatprep.mubr.bf16.mxu0 0
        %1372 = vmatmul.mubr.bf16.gmra.mrb[0].mxu0 %v1306
        %v1373 = vpop.f32.mrb[0].mxu0
        %v1374 = vadd.f32 0.0, %v1373
        %v1375 = vpop.f32.mrb[0].mxu0
        %v1376 = vpop.f32.mrb[0].mxu0
        %v1377 = vadd.f32 0.0, %v1376
        %v1378 = vpop.f32.mrb[0].mxu0
        %1379 = vmatprep.mubr.bf16.mxu0 0
        %1380 = vmatmul.mubr.bf16.gmra.mrb[0].mxu0 %v1309
        %v1381 = vpop.f32.mrb[0].mxu0
        %v1382 = vadd.f32 0.0, %v1381
        %v1383 = vpop.f32.mrb[0].mxu0
        %v1384 = vpop.f32.mrb[0].mxu0
        %v1385 = vadd.f32 0.0, %v1384
        %v1386 = vpop.f32.mrb[0].mxu0
        %1387 = vdwg.mxu0
        %v1389 = vsel %vm1298, %v1294, 0
        %v1392 = vsel %vm1298, %v1295, 0
        %v1395 = vsel %vm1298, %v1296, 0
        %v1398 = vsel %vm1298, %v1297, 0
        %v1401 = vsel %vm1298, %v1276, 0
        %v1404 = vsel %vm1298, %v1277, 0
        %v1407 = vsel %vm1298, %v1278, 0
        %v1410 = vsel %vm1298, %v1279, 0
        %1412 = vmatprep.subr.bf16.mxu0 0
        %1413 = vmatpush1.bf16.xpose.msra.mxu0 %v1401
        %1414 = vmatprep.subr.bf16.mxu0 0
        %1415 = vmatpush1.bf16.xpose.msra.mxu0 %v1404
        %1416 = vmatprep.subr.bf16.mxu0 0
        %1417 = vmatpush1.bf16.xpose.msra.mxu0 %v1407
        %1418 = vmatprep.subr.bf16.mxu0 0
        %1419 = vmatpush1.bf16.xpose.msra.mxu0 %v1410
        %1420 = vmatprep.subr.bf16.mxu0 0
        %1421 = vmatpush1.bf16.xpose.msra.mxu0 0
        %1422 = vmatprep.subr.bf16.mxu0 0
        %1423 = vmatpush1.bf16.xpose.msra.mxu0 0
        %1424 = vmatprep.subr.bf16.mxu0 0
        %1425 = vmatpush1.bf16.xpose.msra.mxu0 0
        %1426 = vmatprep.subr.bf16.mxu0 0
        %1427 = vmatpush1.bf16.xpose.msra.mxu0 0
        %1428 = vmatprep.subr.bf16.mxu0 0
        %1429 = vmatpush1.bf16.xpose.msra.mxu0 0
        %1430 = vmatprep.subr.bf16.mxu0 0
        %1431 = vmatpush1.bf16.xpose.msra.mxu0 0
        %1432 = vmatprep.subr.bf16.mxu0 0
        %1433 = vmatpush1.bf16.xpose.msra.mxu0 0
        %1434 = vmatprep.subr.bf16.mxu0 0
        %1435 = vmatpush1.bf16.xpose.msra.mxu0 0
        %1436 = vmatprep.subr.bf16.mxu0 0
        %1437 = vmatpush1.bf16.xpose.msra.mxu0 0
        %1438 = vmatprep.subr.bf16.mxu0 0
        %1439 = vmatpush1.bf16.xpose.msra.mxu0 0
        %1440 = vmatprep.subr.bf16.mxu0 0
        %1441 = vmatpush1.bf16.xpose.msra.mxu0 0
        %1442 = vmatprep.subr.bf16.mxu0 0
        %1443 = vmatpush1.bf16.xpose.msra.mxu0 0
        %1444 = vmatprep.mubr.bf16.mxu0 0
        %1445 = vmatmul.mubr.bf16.gmra.mrb[0].mxu0 %v1389
        %v1446 = vpop.f32.mrb[0].mxu0
        %v1447 = vadd.f32 0.0, %v1446
        %v1448 = vpop.f32.mrb[0].mxu0
        %v1449 = vpop.f32.mrb[0].mxu0
        %v1450 = vadd.f32 0.0, %v1449
        %v1451 = vpop.f32.mrb[0].mxu0
        %1452 = vmatprep.mubr.bf16.mxu0 0
        %1453 = vmatmul.mubr.bf16.gmra.mrb[0].mxu0 %v1392
        %v1454 = vpop.f32.mrb[0].mxu0
        %v1455 = vadd.f32 0.0, %v1454
        %v1456 = vpop.f32.mrb[0].mxu0
        %v1457 = vpop.f32.mrb[0].mxu0
        %v1458 = vadd.f32 0.0, %v1457
        %v1459 = vpop.f32.mrb[0].mxu0
        %1460 = vmatprep.mubr.bf16.mxu0 0
        %1461 = vmatmul.mubr.bf16.gmra.mrb[0].mxu0 %v1395
        %v1462 = vpop.f32.mrb[0].mxu0
        %v1463 = vadd.f32 0.0, %v1462
        %v1464 = vpop.f32.mrb[0].mxu0
        %v1465 = vpop.f32.mrb[0].mxu0
        %v1466 = vadd.f32 0.0, %v1465
        %v1467 = vpop.f32.mrb[0].mxu0
        %1468 = vmatprep.mubr.bf16.mxu0 0
        %1469 = vmatmul.mubr.bf16.gmra.mrb[0].mxu0 %v1398
        %v1470 = vpop.f32.mrb[0].mxu0
        %v1471 = vadd.f32 0.0, %v1470
        %v1472 = vpop.f32.mrb[0].mxu0
        %v1473 = vpop.f32.mrb[0].mxu0
        %v1474 = vadd.f32 0.0, %v1473
        %v1475 = vpop.f32.mrb[0].mxu0
        %1476 = vdwg.mxu0
        %v1477 = vld [vmem:[#allocation5] sm:$0xff]
        %v1478 = vld [vmem:[#allocation5 + $0x8] sm:$0xff]
        %v1479 = vld [vmem:[#allocation5 + $0x10] sm:$0xff]
        %v1480 = vld [vmem:[#allocation5 + $0x18] sm:$0xff]
        %v1481 = vld [vmem:[#allocation5 + $0x20] sm:$0xff]
        %v1482 = vld [vmem:[#allocation5 + $0x28] sm:$0xff]
        %v1483 = vld [vmem:[#allocation5 + $0x30] sm:$0xff]
        %v1484 = vld [vmem:[#allocation5 + $0x38] sm:$0xff]
        %v1485 = vld [vmem:[#allocation5 + $0x40] sm:$0xff]
        %v1486 = vld [vmem:[#allocation5 + $0x48] sm:$0xff]
        %v1487 = vld [vmem:[#allocation5 + $0x50] sm:$0xff]
        %v1488 = vld [vmem:[#allocation5 + $0x58] sm:$0xff]
        %v1489 = vld [vmem:[#allocation5 + $0x60] sm:$0xff]
        %v1490 = vld [vmem:[#allocation5 + $0x68] sm:$0xff]
        %v1491 = vld [vmem:[#allocation5 + $0x70] sm:$0xff]
        %v1492 = vld [vmem:[#allocation5 + $0x78] sm:$0xff]
        %vm1493 = vcmask 523264
        %v1494 = vsel %vm1493, %v1358, -inf
        %1495 = vmax.xlane.f32.xlu0 %v1494
        %v1496 = vpop.xlane.xlu0 %1495
        %v1497 = vsel %vm1493, %v1361, -inf
        %1498 = vmax.xlane.f32.xlu0 %v1497
        %v1499 = vpop.xlane.xlu0 %1498
        %v1500 = vsel %vm1493, %v1366, -inf
        %1501 = vmax.xlane.f32.xlu0 %v1500
        %v1502 = vpop.xlane.xlu0 %1501
        %v1503 = vsel %vm1493, %v1369, -inf
        %1504 = vmax.xlane.f32.xlu0 %v1503
        %v1505 = vpop.xlane.xlu0 %1504
        %v1506 = vsel %vm1493, %v1374, -inf
        %1507 = vmax.xlane.f32.xlu0 %v1506
        %v1508 = vpop.xlane.xlu0 %1507
        %v1509 = vsel %vm1493, %v1377, -inf
        %1510 = vmax.xlane.f32.xlu0 %v1509
        %v1511 = vpop.xlane.xlu0 %1510
        %v1512 = vsel %vm1493, %v1382, -inf
        %1513 = vmax.xlane.f32.xlu0 %v1512
        %v1514 = vpop.xlane.xlu0 %1513
        %v1515 = vsel %vm1493, %v1385, -inf
        %1516 = vmax.xlane.f32.xlu0 %v1515
        %v1517 = vpop.xlane.xlu0 %1516
        %v1518 = vsel %vm1493, %v1447, -inf
        %1519 = vmax.xlane.f32.xlu0 %v1518
        %v1520 = vpop.xlane.xlu0 %1519
        %v1521 = vsel %vm1493, %v1450, -inf
        %1522 = vmax.xlane.f32.xlu0 %v1521
        %v1523 = vpop.xlane.xlu0 %1522
        %v1524 = vsel %vm1493, %v1455, -inf
        %1525 = vmax.xlane.f32.xlu0 %v1524
        %v1526 = vpop.xlane.xlu0 %1525
        %v1527 = vsel %vm1493, %v1458, -inf
        %1528 = vmax.xlane.f32.xlu0 %v1527
        %v1529 = vpop.xlane.xlu0 %1528
        %v1530 = vsel %vm1493, %v1463, -inf
        %1531 = vmax.xlane.f32.xlu0 %v1530
        %v1532 = vpop.xlane.xlu0 %1531
        %v1533 = vsel %vm1493, %v1466, -inf
        %1534 = vmax.xlane.f32.xlu0 %v1533
        %v1535 = vpop.xlane.xlu0 %1534
        %v1536 = vsel %vm1493, %v1471, -inf
        %1537 = vmax.xlane.f32.xlu0 %v1536
        %v1538 = vpop.xlane.xlu0 %1537
        %v1539 = vsel %vm1493, %v1474, -inf
        %1540 = vmax.xlane.f32.xlu0 %v1539
        %v1541 = vpop.xlane.xlu0 %1540
        %v1542 = vmax.f32 %v1477, %v1496
        %v1543 = vmax.f32 %v1478, %v1499
        %v1544 = vmax.f32 %v1479, %v1502
        %v1545 = vmax.f32 %v1480, %v1505
        %v1546 = vmax.f32 %v1481, %v1508
        %v1547 = vmax.f32 %v1482, %v1511
        %v1548 = vmax.f32 %v1483, %v1514
        %v1549 = vmax.f32 %v1484, %v1517
        %v1550 = vmax.f32 %v1485, %v1520
        %v1551 = vmax.f32 %v1486, %v1523
        %v1552 = vmax.f32 %v1487, %v1526
        %v1553 = vmax.f32 %v1488, %v1529
        %v1554 = vmax.f32 %v1489, %v1532
        %v1555 = vmax.f32 %v1490, %v1535
        %v1556 = vmax.f32 %v1491, %v1538
        %v1557 = vmax.f32 %v1492, %v1541
        %v1558 = vsub.f32 %v1477, %v1542
        %v1559 = vsub.f32 %v1478, %v1543
        %v1560 = vsub.f32 %v1479, %v1544
        %v1561 = vsub.f32 %v1480, %v1545
        %v1562 = vsub.f32 %v1481, %v1546
        %v1563 = vsub.f32 %v1482, %v1547
        %v1564 = vsub.f32 %v1483, %v1548
        %v1565 = vsub.f32 %v1484, %v1549
        %v1566 = vsub.f32 %v1485, %v1550
        %v1567 = vsub.f32 %v1486, %v1551
        %v1568 = vsub.f32 %v1487, %v1552
        %v1569 = vsub.f32 %v1488, %v1553
        %v1570 = vsub.f32 %v1489, %v1554
        %v1571 = vsub.f32 %v1490, %v1555
        %v1572 = vsub.f32 %v1491, %v1556
        %v1573 = vsub.f32 %v1492, %v1557
        %v1574 = vmul.f32 %v1558, 1.442695
        %v1575 = vpow.pop %v1574
        %v1576 = vmul.f32 %v1559, 1.442695
        %v1577 = vpow.pop %v1576
        %v1578 = vmul.f32 %v1560, 1.442695
        %v1579 = vpow.pop %v1578
        %v1580 = vmul.f32 %v1561, 1.442695
        %v1581 = vpow.pop %v1580
        %v1582 = vmul.f32 %v1562, 1.442695
        %v1583 = vpow.pop %v1582
        %v1584 = vmul.f32 %v1563, 1.442695
        %v1585 = vpow.pop %v1584
        %v1586 = vmul.f32 %v1564, 1.442695
        %v1587 = vpow.pop %v1586
        %v1588 = vmul.f32 %v1565, 1.442695
        %v1589 = vpow.pop %v1588
        %v1590 = vmul.f32 %v1566, 1.442695
        %v1591 = vpow.pop %v1590
        %v1592 = vmul.f32 %v1567, 1.442695
        %v1593 = vpow.pop %v1592
        %v1594 = vmul.f32 %v1568, 1.442695
        %v1595 = vpow.pop %v1594
        %v1596 = vmul.f32 %v1569, 1.442695
        %v1597 = vpow.pop %v1596
        %v1598 = vmul.f32 %v1570, 1.442695
        %v1599 = vpow.pop %v1598
        %v1600 = vmul.f32 %v1571, 1.442695
        %v1601 = vpow.pop %v1600
        %v1602 = vmul.f32 %v1572, 1.442695
        %v1603 = vpow.pop %v1602
        %v1604 = vmul.f32 %v1573, 1.442695
        %v1605 = vpow.pop %v1604
        %1607 = vset.pattern.permute.xlu0 0
        %1608 = vperm.xlu0 %1607, %v1542
        %v1609 = vpop.permute.xlu0 %1608
        %1612 = vset.pattern.permute.xlu0 0
        %1613 = vperm.xlu0 %1612, %v1543
        %v1614 = vpop.permute.xlu0 %1613
        %1617 = vset.pattern.permute.xlu0 0
        %1618 = vperm.xlu0 %1617, %v1544
        %v1619 = vpop.permute.xlu0 %1618
        %1622 = vset.pattern.permute.xlu0 0
        %1623 = vperm.xlu0 %1622, %v1545
        %v1624 = vpop.permute.xlu0 %1623
        %1627 = vset.pattern.permute.xlu0 0
        %1628 = vperm.xlu0 %1627, %v1546
        %v1629 = vpop.permute.xlu0 %1628
        %1632 = vset.pattern.permute.xlu0 0
        %1633 = vperm.xlu0 %1632, %v1547
        %v1634 = vpop.permute.xlu0 %1633
        %1637 = vset.pattern.permute.xlu0 0
        %1638 = vperm.xlu0 %1637, %v1548
        %v1639 = vpop.permute.xlu0 %1638
        %1642 = vset.pattern.permute.xlu0 0
        %1643 = vperm.xlu0 %1642, %v1549
        %v1644 = vpop.permute.xlu0 %1643
        %1647 = vset.pattern.permute.xlu0 0
        %1648 = vperm.xlu0 %1647, %v1550
        %v1649 = vpop.permute.xlu0 %1648
        %1652 = vset.pattern.permute.xlu0 0
        %1653 = vperm.xlu0 %1652, %v1551
        %v1654 = vpop.permute.xlu0 %1653
        %1657 = vset.pattern.permute.xlu0 0
        %1658 = vperm.xlu0 %1657, %v1552
        %v1659 = vpop.permute.xlu0 %1658
        %1662 = vset.pattern.permute.xlu0 0
        %1663 = vperm.xlu0 %1662, %v1553
        %v1664 = vpop.permute.xlu0 %1663
        %1667 = vset.pattern.permute.xlu0 0
        %1668 = vperm.xlu0 %1667, %v1554
        %v1669 = vpop.permute.xlu0 %1668
        %1672 = vset.pattern.permute.xlu0 0
        %1673 = vperm.xlu0 %1672, %v1555
        %v1674 = vpop.permute.xlu0 %1673
        %1677 = vset.pattern.permute.xlu0 0
        %1678 = vperm.xlu0 %1677, %v1556
        %v1679 = vpop.permute.xlu0 %1678
        %1682 = vset.pattern.permute.xlu0 0
        %1683 = vperm.xlu0 %1682, %v1557
        %v1684 = vpop.permute.xlu0 %1683
        %v1686 = vsub.f32 %v1358, %v1609
        %v1687 = vsub.f32 %v1361, %v1614
        %v1688 = vsub.f32 %v1366, %v1619
        %v1689 = vsub.f32 %v1369, %v1624
        %v1690 = vsub.f32 %v1374, %v1629
        %v1691 = vsub.f32 %v1377, %v1634
        %v1692 = vsub.f32 %v1382, %v1639
        %v1693 = vsub.f32 %v1385, %v1644
        %v1694 = vsub.f32 %v1447, %v1649
        %v1695 = vsub.f32 %v1450, %v1654
        %v1696 = vsub.f32 %v1455, %v1659
        %v1697 = vsub.f32 %v1458, %v1664
        %v1698 = vsub.f32 %v1463, %v1669
        %v1699 = vsub.f32 %v1466, %v1674
        %v1700 = vsub.f32 %v1471, %v1679
        %v1701 = vsub.f32 %v1474, %v1684
        %v1702 = vmul.f32 %v1686, 1.442695
        %v1703 = vpow.pop %v1702
        %v1704 = vmul.f32 %v1687, 1.442695
        %v1705 = vpow.pop %v1704
        %v1706 = vmul.f32 %v1688, 1.442695
        %v1707 = vpow.pop %v1706
        %v1708 = vmul.f32 %v1689, 1.442695
        %v1709 = vpow.pop %v1708
        %v1710 = vmul.f32 %v1690, 1.442695
        %v1711 = vpow.pop %v1710
        %v1712 = vmul.f32 %v1691, 1.442695
        %v1713 = vpow.pop %v1712
        %v1714 = vmul.f32 %v1692, 1.442695
        %v1715 = vpow.pop %v1714
        %v1716 = vmul.f32 %v1693, 1.442695
        %v1717 = vpow.pop %v1716
        %v1718 = vmul.f32 %v1694, 1.442695
        %v1719 = vpow.pop %v1718
        %v1720 = vmul.f32 %v1695, 1.442695
        %v1721 = vpow.pop %v1720
        %v1722 = vmul.f32 %v1696, 1.442695
        %v1723 = vpow.pop %v1722
        %v1724 = vmul.f32 %v1697, 1.442695
        %v1725 = vpow.pop %v1724
        %v1726 = vmul.f32 %v1698, 1.442695
        %v1727 = vpow.pop %v1726
        %v1728 = vmul.f32 %v1699, 1.442695
        %v1729 = vpow.pop %v1728
        %v1730 = vmul.f32 %v1700, 1.442695
        %v1731 = vpow.pop %v1730
        %v1732 = vmul.f32 %v1701, 1.442695
        %v1733 = vpow.pop %v1732
        %v1734 = vld [vmem:[#allocation6] sm:$0xff]
        %v1735 = vld [vmem:[#allocation6 + $0x8] sm:$0xff]
        %v1736 = vld [vmem:[#allocation6 + $0x10] sm:$0xff]
        %v1737 = vld [vmem:[#allocation6 + $0x18] sm:$0xff]
        %v1738 = vld [vmem:[#allocation6 + $0x20] sm:$0xff]
        %v1739 = vld [vmem:[#allocation6 + $0x28] sm:$0xff]
        %v1740 = vld [vmem:[#allocation6 + $0x30] sm:$0xff]
        %v1741 = vld [vmem:[#allocation6 + $0x38] sm:$0xff]
        %v1742 = vld [vmem:[#allocation6 + $0x40] sm:$0xff]
        %v1743 = vld [vmem:[#allocation6 + $0x48] sm:$0xff]
        %v1744 = vld [vmem:[#allocation6 + $0x50] sm:$0xff]
        %v1745 = vld [vmem:[#allocation6 + $0x58] sm:$0xff]
        %v1746 = vld [vmem:[#allocation6 + $0x60] sm:$0xff]
        %v1747 = vld [vmem:[#allocation6 + $0x68] sm:$0xff]
        %v1748 = vld [vmem:[#allocation6 + $0x70] sm:$0xff]
        %v1749 = vld [vmem:[#allocation6 + $0x78] sm:$0xff]
        %v1750 = vmul.f32 %v1575, %v1734
        %v1751 = vmul.f32 %v1577, %v1735
        %v1752 = vmul.f32 %v1579, %v1736
        %v1753 = vmul.f32 %v1581, %v1737
        %v1754 = vmul.f32 %v1583, %v1738
        %v1755 = vmul.f32 %v1585, %v1739
        %v1756 = vmul.f32 %v1587, %v1740
        %v1757 = vmul.f32 %v1589, %v1741
        %v1758 = vmul.f32 %v1591, %v1742
        %v1759 = vmul.f32 %v1593, %v1743
        %v1760 = vmul.f32 %v1595, %v1744
        %v1761 = vmul.f32 %v1597, %v1745
        %v1762 = vmul.f32 %v1599, %v1746
        %v1763 = vmul.f32 %v1601, %v1747
        %v1764 = vmul.f32 %v1603, %v1748
        %v1765 = vmul.f32 %v1605, %v1749
        %v1766 = vsel %vm1493, %v1703, 0.0
        %1767 = vadd.xlane.f32.xlu0 %v1766
        %v1768 = vpop.xlane.xlu0 %1767
        %v1769 = vsel %vm1493, %v1705, 0.0
        %1770 = vadd.xlane.f32.xlu0 %v1769
        %v1771 = vpop.xlane.xlu0 %1770
        %v1772 = vsel %vm1493, %v1707, 0.0
        %1773 = vadd.xlane.f32.xlu0 %v1772
        %v1774 = vpop.xlane.xlu0 %1773
        %v1775 = vsel %vm1493, %v1709, 0.0
        %1776 = vadd.xlane.f32.xlu0 %v1775
        %v1777 = vpop.xlane.xlu0 %1776
        %v1778 = vsel %vm1493, %v1711, 0.0
        %1779 = vadd.xlane.f32.xlu0 %v1778
        %v1780 = vpop.xlane.xlu0 %1779
        %v1781 = vsel %vm1493, %v1713, 0.0
        %1782 = vadd.xlane.f32.xlu0 %v1781
        %v1783 = vpop.xlane.xlu0 %1782
        %v1784 = vsel %vm1493, %v1715, 0.0
        %1785 = vadd.xlane.f32.xlu0 %v1784
        %v1786 = vpop.xlane.xlu0 %1785
        %v1787 = vsel %vm1493, %v1717, 0.0
        %1788 = vadd.xlane.f32.xlu0 %v1787
        %v1789 = vpop.xlane.xlu0 %1788
        %v1790 = vsel %vm1493, %v1719, 0.0
        %1791 = vadd.xlane.f32.xlu0 %v1790
        %v1792 = vpop.xlane.xlu0 %1791
        %v1793 = vsel %vm1493, %v1721, 0.0
        %1794 = vadd.xlane.f32.xlu0 %v1793
        %v1795 = vpop.xlane.xlu0 %1794
        %v1796 = vsel %vm1493, %v1723, 0.0
        %1797 = vadd.xlane.f32.xlu0 %v1796
        %v1798 = vpop.xlane.xlu0 %1797
        %v1799 = vsel %vm1493, %v1725, 0.0
        %1800 = vadd.xlane.f32.xlu0 %v1799
        %v1801 = vpop.xlane.xlu0 %1800
        %v1802 = vsel %vm1493, %v1727, 0.0
        %1803 = vadd.xlane.f32.xlu0 %v1802
        %v1804 = vpop.xlane.xlu0 %1803
        %v1805 = vsel %vm1493, %v1729, 0.0
        %1806 = vadd.xlane.f32.xlu0 %v1805
        %v1807 = vpop.xlane.xlu0 %1806
        %v1808 = vsel %vm1493, %v1731, 0.0
        %1809 = vadd.xlane.f32.xlu0 %v1808
        %v1810 = vpop.xlane.xlu0 %1809
        %v1811 = vsel %vm1493, %v1733, 0.0
        %1812 = vadd.xlane.f32.xlu0 %v1811
        %v1813 = vpop.xlane.xlu0 %1812
        %v1814 = vadd.f32 %v1750, %v1768
        %v1815 = vadd.f32 %v1751, %v1771
        %v1816 = vadd.f32 %v1752, %v1774
        %v1817 = vadd.f32 %v1753, %v1777
        %v1818 = vadd.f32 %v1754, %v1780
        %v1819 = vadd.f32 %v1755, %v1783
        %v1820 = vadd.f32 %v1756, %v1786
        %v1821 = vadd.f32 %v1757, %v1789
        %v1822 = vadd.f32 %v1758, %v1792
        %v1823 = vadd.f32 %v1759, %v1795
        %v1824 = vadd.f32 %v1760, %v1798
        %v1825 = vadd.f32 %v1761, %v1801
        %v1826 = vadd.f32 %v1762, %v1804
        %v1827 = vadd.f32 %v1763, %v1807
        %v1828 = vadd.f32 %v1764, %v1810
        %v1829 = vadd.f32 %v1765, %v1813
        %vm1830 = vcmask 7168
        %1831 = vst.msk [vmem:[#allocation6] sm:$0xff] %vm1830, %v1814
        %1832 = vst.msk [vmem:[#allocation6 + $0x8] sm:$0xff] %vm1830, %v1815
        %1833 = vst.msk [vmem:[#allocation6 + $0x10] sm:$0xff] %vm1830, %v1816
        %1834 = vst.msk [vmem:[#allocation6 + $0x18] sm:$0xff] %vm1830, %v1817
        %1835 = vst.msk [vmem:[#allocation6 + $0x20] sm:$0xff] %vm1830, %v1818
        %1836 = vst.msk [vmem:[#allocation6 + $0x28] sm:$0xff] %vm1830, %v1819
        %1837 = vst.msk [vmem:[#allocation6 + $0x30] sm:$0xff] %vm1830, %v1820
        %1838 = vst.msk [vmem:[#allocation6 + $0x38] sm:$0xff] %vm1830, %v1821
        %1839 = vst.msk [vmem:[#allocation6 + $0x40] sm:$0xff] %vm1830, %v1822
        %1840 = vst.msk [vmem:[#allocation6 + $0x48] sm:$0xff] %vm1830, %v1823
        %1841 = vst.msk [vmem:[#allocation6 + $0x50] sm:$0xff] %vm1830, %v1824
        %1842 = vst.msk [vmem:[#allocation6 + $0x58] sm:$0xff] %vm1830, %v1825
        %1843 = vst.msk [vmem:[#allocation6 + $0x60] sm:$0xff] %vm1830, %v1826
        %1844 = vst.msk [vmem:[#allocation6 + $0x68] sm:$0xff] %vm1830, %v1827
        %1845 = vst.msk [vmem:[#allocation6 + $0x70] sm:$0xff] %vm1830, %v1828
        %1846 = vst.msk [vmem:[#allocation6 + $0x78] sm:$0xff] %vm1830, %v1829
        %v1847 = vld [vmem:[#allocation7] sm:$0xff]
        %v1848 = vld [vmem:[#allocation7 + $0x8] sm:$0xff]
        %v1849 = vld [vmem:[#allocation7 + $0x10] sm:$0xff]
        %v1850 = vld [vmem:[#allocation7 + $0x18] sm:$0xff]
        %v1851 = vld [vmem:[#allocation7 + $0x20] sm:$0xff]
        %v1852 = vld [vmem:[#allocation7 + $0x28] sm:$0xff]
        %v1853 = vld [vmem:[#allocation7 + $0x30] sm:$0xff]
        %v1854 = vld [vmem:[#allocation7 + $0x38] sm:$0xff]
        %v1855 = vld [vmem:[#allocation7 + $0x40] sm:$0xff]
        %v1856 = vld [vmem:[#allocation7 + $0x48] sm:$0xff]
        %v1857 = vld [vmem:[#allocation7 + $0x50] sm:$0xff]
        %v1858 = vld [vmem:[#allocation7 + $0x58] sm:$0xff]
        %v1859 = vld [vmem:[#allocation7 + $0x60] sm:$0xff]
        %v1860 = vld [vmem:[#allocation7 + $0x68] sm:$0xff]
        %v1861 = vld [vmem:[#allocation7 + $0x70] sm:$0xff]
        %v1862 = vld [vmem:[#allocation7 + $0x78] sm:$0xff]
        %1864 = vset.pattern.permute.xlu0 0
        %1865 = vperm.xlu0 %1864, %v1575
        %v1866 = vpop.permute.xlu0 %1865
        %1869 = vset.pattern.permute.xlu0 0
        %1870 = vperm.xlu0 %1869, %v1577
        %v1871 = vpop.permute.xlu0 %1870
        %1874 = vset.pattern.permute.xlu0 0
        %1875 = vperm.xlu0 %1874, %v1579
        %v1876 = vpop.permute.xlu0 %1875
        %1879 = vset.pattern.permute.xlu0 0
        %1880 = vperm.xlu0 %1879, %v1581
        %v1881 = vpop.permute.xlu0 %1880
        %1884 = vset.pattern.permute.xlu0 0
        %1885 = vperm.xlu0 %1884, %v1583
        %v1886 = vpop.permute.xlu0 %1885
        %1889 = vset.pattern.permute.xlu0 0
        %1890 = vperm.xlu0 %1889, %v1585
        %v1891 = vpop.permute.xlu0 %1890
        %1894 = vset.pattern.permute.xlu0 0
        %1895 = vperm.xlu0 %1894, %v1587
        %v1896 = vpop.permute.xlu0 %1895
        %1899 = vset.pattern.permute.xlu0 0
        %1900 = vperm.xlu0 %1899, %v1589
        %v1901 = vpop.permute.xlu0 %1900
        %1904 = vset.pattern.permute.xlu0 0
        %1905 = vperm.xlu0 %1904, %v1591
        %v1906 = vpop.permute.xlu0 %1905
        %1909 = vset.pattern.permute.xlu0 0
        %1910 = vperm.xlu0 %1909, %v1593
        %v1911 = vpop.permute.xlu0 %1910
        %1914 = vset.pattern.permute.xlu0 0
        %1915 = vperm.xlu0 %1914, %v1595
        %v1916 = vpop.permute.xlu0 %1915
        %1919 = vset.pattern.permute.xlu0 0
        %1920 = vperm.xlu0 %1919, %v1597
        %v1921 = vpop.permute.xlu0 %1920
        %1924 = vset.pattern.permute.xlu0 0
        %1925 = vperm.xlu0 %1924, %v1599
        %v1926 = vpop.permute.xlu0 %1925
        %1929 = vset.pattern.permute.xlu0 0
        %1930 = vperm.xlu0 %1929, %v1601
        %v1931 = vpop.permute.xlu0 %1930
        %1934 = vset.pattern.permute.xlu0 0
        %1935 = vperm.xlu0 %1934, %v1603
        %v1936 = vpop.permute.xlu0 %1935
        %1939 = vset.pattern.permute.xlu0 0
        %1940 = vperm.xlu0 %1939, %v1605
        %v1941 = vpop.permute.xlu0 %1940
        %v1943 = vmul.f32 %v1866, %v1847
        %v1944 = vmul.f32 %v1871, %v1848
        %v1945 = vmul.f32 %v1876, %v1849
        %v1946 = vmul.f32 %v1881, %v1850
        %v1947 = vmul.f32 %v1886, %v1851
        %v1948 = vmul.f32 %v1891, %v1852
        %v1949 = vmul.f32 %v1896, %v1853
        %v1950 = vmul.f32 %v1901, %v1854
        %v1951 = vmul.f32 %v1906, %v1855
        %v1952 = vmul.f32 %v1911, %v1856
        %v1953 = vmul.f32 %v1916, %v1857
        %v1954 = vmul.f32 %v1921, %v1858
        %v1955 = vmul.f32 %v1926, %v1859
        %v1956 = vmul.f32 %v1931, %v1860
        %v1957 = vmul.f32 %v1936, %v1861
        %v1958 = vmul.f32 %v1941, %v1862
        %v1959 = vpack.c.bf16 %v1705, %v1703
        %v1960 = vpack.c.bf16 %v1709, %v1707
        %v1961 = vpack.c.bf16 %v1713, %v1711
        %v1962 = vpack.c.bf16 %v1717, %v1715
        %v1963 = vpack.c.bf16 %v1721, %v1719
        %v1964 = vpack.c.bf16 %v1725, %v1723
        %v1965 = vpack.c.bf16 %v1729, %v1727
        %v1966 = vpack.c.bf16 %v1733, %v1731
        %v1968 = vsel %vm1493, %v1959, 0
        %v1971 = vsel %vm1493, %v1960, 0
        %v1974 = vsel %vm1493, %v1961, 0
        %v1977 = vsel %vm1493, %v1962, 0
        %1979 = vmatprep.subr.bf16.mxu0 0
        %1980 = vmatpush1.bf16.msra.mxu0 %v1282
        %1981 = vmatprep.subr.bf16.mxu0 0
        %1982 = vmatpush1.bf16.msra.mxu0 %v1283
        %1983 = vmatprep.subr.bf16.mxu0 0
        %1984 = vmatpush1.bf16.msra.mxu0 %v1284
        %1985 = vmatprep.subr.bf16.mxu0 0
        %1986 = vmatpush1.bf16.msra.mxu0 %v1285
        %1987 = vmatprep.subr.bf16.mxu0 0
        %1988 = vmatpush1.bf16.msra.mxu0 0
        %1989 = vmatprep.subr.bf16.mxu0 0
        %1990 = vmatpush1.bf16.msra.mxu0 0
        %1991 = vmatprep.subr.bf16.mxu0 0
        %1992 = vmatpush1.bf16.msra.mxu0 0
        %1993 = vmatprep.subr.bf16.mxu0 0
        %1994 = vmatpush1.bf16.msra.mxu0 0
        %1995 = vmatprep.subr.bf16.mxu0 0
        %1996 = vmatpush1.bf16.msra.mxu0 0
        %1997 = vmatprep.subr.bf16.mxu0 0
        %1998 = vmatpush1.bf16.msra.mxu0 0
        %1999 = vmatprep.subr.bf16.mxu0 0
        %2000 = vmatpush1.bf16.msra.mxu0 0
        %2001 = vmatprep.subr.bf16.mxu0 0
        %2002 = vmatpush1.bf16.msra.mxu0 0
        %2003 = vmatprep.subr.bf16.mxu0 0
        %2004 = vmatpush1.bf16.msra.mxu0 0
        %2005 = vmatprep.subr.bf16.mxu0 0
        %2006 = vmatpush1.bf16.msra.mxu0 0
        %2007 = vmatprep.subr.bf16.mxu0 0
        %2008 = vmatpush1.bf16.msra.mxu0 0
        %2009 = vmatprep.subr.bf16.mxu0 0
        %2010 = vmatpush1.bf16.msra.mxu0 0
        %2011 = vmatprep.mubr.bf16.mxu0 0
        %2012 = vmatmul.mubr.bf16.gmra.mrb[0].mxu0 %v1968
        %v2013 = vpop.f32.mrb[0].mxu0
        %v2014 = vadd.f32 0.0, %v2013
        %v2015 = vpop.f32.mrb[0].mxu0
        %v2016 = vpop.f32.mrb[0].mxu0
        %v2017 = vadd.f32 0.0, %v2016
        %v2018 = vpop.f32.mrb[0].mxu0
        %2019 = vmatprep.mubr.bf16.mxu0 0
        %2020 = vmatmul.mubr.bf16.gmra.mrb[0].mxu0 %v1971
        %v2021 = vpop.f32.mrb[0].mxu0
        %v2022 = vadd.f32 0.0, %v2021
        %v2023 = vpop.f32.mrb[0].mxu0
        %v2024 = vpop.f32.mrb[0].mxu0
        %v2025 = vadd.f32 0.0, %v2024
        %v2026 = vpop.f32.mrb[0].mxu0
        %2027 = vmatprep.mubr.bf16.mxu0 0
        %2028 = vmatmul.mubr.bf16.gmra.mrb[0].mxu0 %v1974
        %v2029 = vpop.f32.mrb[0].mxu0
        %v2030 = vadd.f32 0.0, %v2029
        %v2031 = vpop.f32.mrb[0].mxu0
        %v2032 = vpop.f32.mrb[0].mxu0
        %v2033 = vadd.f32 0.0, %v2032
        %v2034 = vpop.f32.mrb[0].mxu0
        %2035 = vmatprep.mubr.bf16.mxu0 0
        %2036 = vmatmul.mubr.bf16.gmra.mrb[0].mxu0 %v1977
        %v2037 = vpop.f32.mrb[0].mxu0
        %v2038 = vadd.f32 0.0, %v2037
        %v2039 = vpop.f32.mrb[0].mxu0
        %v2040 = vpop.f32.mrb[0].mxu0
        %v2041 = vadd.f32 0.0, %v2040
        %v2042 = vpop.f32.mrb[0].mxu0
        %2043 = vdwg.mxu0
        %v2045 = vsel %vm1493, %v1963, 0
        %v2048 = vsel %vm1493, %v1964, 0
        %v2051 = vsel %vm1493, %v1965, 0
        %v2054 = vsel %vm1493, %v1966, 0
        %2056 = vmatprep.subr.bf16.mxu0 0
        %2057 = vmatpush1.bf16.msra.mxu0 %v1286
        %2058 = vmatprep.subr.bf16.mxu0 0
        %2059 = vmatpush1.bf16.msra.mxu0 %v1287
        %2060 = vmatprep.subr.bf16.mxu0 0
        %2061 = vmatpush1.bf16.msra.mxu0 %v1288
        %2062 = vmatprep.subr.bf16.mxu0 0
        %2063 = vmatpush1.bf16.msra.mxu0 %v1289
        %2064 = vmatprep.subr.bf16.mxu0 0
        %2065 = vmatpush1.bf16.msra.mxu0 0
        %2066 = vmatprep.subr.bf16.mxu0 0
        %2067 = vmatpush1.bf16.msra.mxu0 0
        %2068 = vmatprep.subr.bf16.mxu0 0
        %2069 = vmatpush1.bf16.msra.mxu0 0
        %2070 = vmatprep.subr.bf16.mxu0 0
        %2071 = vmatpush1.bf16.msra.mxu0 0
        %2072 = vmatprep.subr.bf16.mxu0 0
        %2073 = vmatpush1.bf16.msra.mxu0 0
        %2074 = vmatprep.subr.bf16.mxu0 0
        %2075 = vmatpush1.bf16.msra.mxu0 0
        %2076 = vmatprep.subr.bf16.mxu0 0
        %2077 = vmatpush1.bf16.msra.mxu0 0
        %2078 = vmatprep.subr.bf16.mxu0 0
        %2079 = vmatpush1.bf16.msra.mxu0 0
        %2080 = vmatprep.subr.bf16.mxu0 0
        %2081 = vmatpush1.bf16.msra.mxu0 0
        %2082 = vmatprep.subr.bf16.mxu0 0
        %2083 = vmatpush1.bf16.msra.mxu0 0
        %2084 = vmatprep.subr.bf16.mxu0 0
        %2085 = vmatpush1.bf16.msra.mxu0 0
        %2086 = vmatprep.subr.bf16.mxu0 0
        %2087 = vmatpush1.bf16.msra.mxu0 0
        %2088 = vmatprep.mubr.bf16.mxu0 0
        %2089 = vmatmul.mubr.bf16.gmra.mrb[0].mxu0 %v2045
        %v2090 = vpop.f32.mrb[0].mxu0
        %v2091 = vadd.f32 0.0, %v2090
        %v2092 = vpop.f32.mrb[0].mxu0
        %v2093 = vpop.f32.mrb[0].mxu0
        %v2094 = vadd.f32 0.0, %v2093
        %v2095 = vpop.f32.mrb[0].mxu0
        %2096 = vmatprep.mubr.bf16.mxu0 0
        %2097 = vmatmul.mubr.bf16.gmra.mrb[0].mxu0 %v2048
        %v2098 = vpop.f32.mrb[0].mxu0
        %v2099 = vadd.f32 0.0, %v2098
        %v2100 = vpop.f32.mrb[0].mxu0
        %v2101 = vpop.f32.mrb[0].mxu0
        %v2102 = vadd.f32 0.0, %v2101
        %v2103 = vpop.f32.mrb[0].mxu0
        %2104 = vmatprep.mubr.bf16.mxu0 0
        %2105 = vmatmul.mubr.bf16.gmra.mrb[0].mxu0 %v2051
        %v2106 = vpop.f32.mrb[0].mxu0
        %v2107 = vadd.f32 0.0, %v2106
        %v2108 = vpop.f32.mrb[0].mxu0
        %v2109 = vpop.f32.mrb[0].mxu0
        %v2110 = vadd.f32 0.0, %v2109
        %v2111 = vpop.f32.mrb[0].mxu0
        %2112 = vmatprep.mubr.bf16.mxu0 0
        %2113 = vmatmul.mubr.bf16.gmra.mrb[0].mxu0 %v2054
        %v2114 = vpop.f32.mrb[0].mxu0
        %v2115 = vadd.f32 0.0, %v2114
        %v2116 = vpop.f32.mrb[0].mxu0
        %v2117 = vpop.f32.mrb[0].mxu0
        %v2118 = vadd.f32 0.0, %v2117
        %v2119 = vpop.f32.mrb[0].mxu0
        %2120 = vdwg.mxu0
        %v2121 = vadd.f32 %v1943, %v2014
        %v2122 = vadd.f32 %v1944, %v2017
        %v2123 = vadd.f32 %v1945, %v2022
        %v2124 = vadd.f32 %v1946, %v2025
        %v2125 = vadd.f32 %v1947, %v2030
        %v2126 = vadd.f32 %v1948, %v2033
        %v2127 = vadd.f32 %v1949, %v2038
        %v2128 = vadd.f32 %v1950, %v2041
        %v2129 = vadd.f32 %v1951, %v2091
        %v2130 = vadd.f32 %v1952, %v2094
        %v2131 = vadd.f32 %v1953, %v2099
        %v2132 = vadd.f32 %v1954, %v2102
        %v2133 = vadd.f32 %v1955, %v2107
        %v2134 = vadd.f32 %v1956, %v2110
        %v2135 = vadd.f32 %v1957, %v2115
        %v2136 = vadd.f32 %v1958, %v2118
        %2137 = vst.msk [vmem:[#allocation7] sm:$0xff] %vm1298, %v2121
        %2138 = vst.msk [vmem:[#allocation7 + $0x8] sm:$0xff] %vm1298, %v2122
        %2139 = vst.msk [vmem:[#allocation7 + $0x10] sm:$0xff] %vm1298, %v2123
        %2140 = vst.msk [vmem:[#allocation7 + $0x18] sm:$0xff] %vm1298, %v2124
        %2141 = vst.msk [vmem:[#allocation7 + $0x20] sm:$0xff] %vm1298, %v2125
        %2142 = vst.msk [vmem:[#allocation7 + $0x28] sm:$0xff] %vm1298, %v2126
        %2143 = vst.msk [vmem:[#allocation7 + $0x30] sm:$0xff] %vm1298, %v2127
        %2144 = vst.msk [vmem:[#allocation7 + $0x38] sm:$0xff] %vm1298, %v2128
        %2145 = vst.msk [vmem:[#allocation7 + $0x40] sm:$0xff] %vm1298, %v2129
        %2146 = vst.msk [vmem:[#allocation7 + $0x48] sm:$0xff] %vm1298, %v2130
        %2147 = vst.msk [vmem:[#allocation7 + $0x50] sm:$0xff] %vm1298, %v2131
        %2148 = vst.msk [vmem:[#allocation7 + $0x58] sm:$0xff] %vm1298, %v2132
        %2149 = vst.msk [vmem:[#allocation7 + $0x60] sm:$0xff] %vm1298, %v2133
        %2150 = vst.msk [vmem:[#allocation7 + $0x68] sm:$0xff] %vm1298, %v2134
        %2151 = vst.msk [vmem:[#allocation7 + $0x70] sm:$0xff] %vm1298, %v2135
        %2152 = vst.msk [vmem:[#allocation7 + $0x78] sm:$0xff] %vm1298, %v2136
        %2153 = vst.msk [vmem:[#allocation5] sm:$0xff] %vm1830, %v1542
        %2154 = vst.msk [vmem:[#allocation5 + $0x8] sm:$0xff] %vm1830, %v1543
        %2155 = vst.msk [vmem:[#allocation5 + $0x10] sm:$0xff] %vm1830, %v1544
        %2156 = vst.msk [vmem:[#allocation5 + $0x18] sm:$0xff] %vm1830, %v1545
        %2157 = vst.msk [vmem:[#allocation5 + $0x20] sm:$0xff] %vm1830, %v1546
        %2158 = vst.msk [vmem:[#allocation5 + $0x28] sm:$0xff] %vm1830, %v1547
        %2159 = vst.msk [vmem:[#allocation5 + $0x30] sm:$0xff] %vm1830, %v1548
        %2160 = vst.msk [vmem:[#allocation5 + $0x38] sm:$0xff] %vm1830, %v1549
        %2161 = vst.msk [vmem:[#allocation5 + $0x40] sm:$0xff] %vm1830, %v1550
        %2162 = vst.msk [vmem:[#allocation5 + $0x48] sm:$0xff] %vm1830, %v1551
        %2163 = vst.msk [vmem:[#allocation5 + $0x50] sm:$0xff] %vm1830, %v1552
        %2164 = vst.msk [vmem:[#allocation5 + $0x58] sm:$0xff] %vm1830, %v1553
        %2165 = vst.msk [vmem:[#allocation5 + $0x60] sm:$0xff] %vm1830, %v1554
        %2166 = vst.msk [vmem:[#allocation5 + $0x68] sm:$0xff] %vm1830, %v1555
        %2167 = vst.msk [vmem:[#allocation5 + $0x70] sm:$0xff] %vm1830, %v1556
        %2168 = vst.msk [vmem:[#allocation5 + $0x78] sm:$0xff] %vm1830, %v1557
        // Predicated region
        $region97: #{tpu_custom_call.1} parent=55 // pred_check
          %p2169 = pneg %p474
        $region98: #{tpu_custom_call.1} parent=55 // pred_check_branch
          %2171 = sbr.rel (%p2169) target = $region100
        $region99: #{tpu_custom_call.1} parent=55 // pred_region
          %v2172 = vld [vmem:[#allocation6] sm:$0xff]
          %v2173 = vld [vmem:[#allocation6 + $0x8] sm:$0xff]
          %v2174 = vld [vmem:[#allocation6 + $0x10] sm:$0xff]
          %v2175 = vld [vmem:[#allocation6 + $0x18] sm:$0xff]
          %v2176 = vld [vmem:[#allocation6 + $0x20] sm:$0xff]
          %v2177 = vld [vmem:[#allocation6 + $0x28] sm:$0xff]
          %v2178 = vld [vmem:[#allocation6 + $0x30] sm:$0xff]
          %v2179 = vld [vmem:[#allocation6 + $0x38] sm:$0xff]
          %v2180 = vld [vmem:[#allocation6 + $0x40] sm:$0xff]
          %v2181 = vld [vmem:[#allocation6 + $0x48] sm:$0xff]
          %v2182 = vld [vmem:[#allocation6 + $0x50] sm:$0xff]
          %v2183 = vld [vmem:[#allocation6 + $0x58] sm:$0xff]
          %v2184 = vld [vmem:[#allocation6 + $0x60] sm:$0xff]
          %v2185 = vld [vmem:[#allocation6 + $0x68] sm:$0xff]
          %v2186 = vld [vmem:[#allocation6 + $0x70] sm:$0xff]
          %v2187 = vld [vmem:[#allocation6 + $0x78] sm:$0xff]
          %v2188 = vrcp.pop %v2172
          %v2189 = vrcp.pop %v2173
          %v2190 = vrcp.pop %v2174
          %v2191 = vrcp.pop %v2175
          %v2192 = vrcp.pop %v2176
          %v2193 = vrcp.pop %v2177
          %v2194 = vrcp.pop %v2178
          %v2195 = vrcp.pop %v2179
          %v2196 = vrcp.pop %v2180
          %v2197 = vrcp.pop %v2181
          %v2198 = vrcp.pop %v2182
          %v2199 = vrcp.pop %v2183
          %v2200 = vrcp.pop %v2184
          %v2201 = vrcp.pop %v2185
          %v2202 = vrcp.pop %v2186
          %v2203 = vrcp.pop %v2187
          %v2204 = vld [vmem:[#allocation7] sm:$0xff]
          %v2205 = vld [vmem:[#allocation7 + $0x8] sm:$0xff]
          %v2206 = vld [vmem:[#allocation7 + $0x10] sm:$0xff]
          %v2207 = vld [vmem:[#allocation7 + $0x18] sm:$0xff]
          %v2208 = vld [vmem:[#allocation7 + $0x20] sm:$0xff]
          %v2209 = vld [vmem:[#allocation7 + $0x28] sm:$0xff]
          %v2210 = vld [vmem:[#allocation7 + $0x30] sm:$0xff]
          %v2211 = vld [vmem:[#allocation7 + $0x38] sm:$0xff]
          %2213 = vset.pattern.permute.xlu0 0
          %2214 = vperm.xlu0 %2213, %v2188
          %v2215 = vpop.permute.xlu0 %2214
          %2218 = vset.pattern.permute.xlu0 0
          %2219 = vperm.xlu0 %2218, %v2189
          %v2220 = vpop.permute.xlu0 %2219
          %2223 = vset.pattern.permute.xlu0 0
          %2224 = vperm.xlu0 %2223, %v2190
          %v2225 = vpop.permute.xlu0 %2224
          %2228 = vset.pattern.permute.xlu0 0
          %2229 = vperm.xlu0 %2228, %v2191
          %v2230 = vpop.permute.xlu0 %2229
          %2233 = vset.pattern.permute.xlu0 0
          %2234 = vperm.xlu0 %2233, %v2192
          %v2235 = vpop.permute.xlu0 %2234
          %2238 = vset.pattern.permute.xlu0 0
          %2239 = vperm.xlu0 %2238, %v2193
          %v2240 = vpop.permute.xlu0 %2239
          %2243 = vset.pattern.permute.xlu0 0
          %2244 = vperm.xlu0 %2243, %v2194
          %v2245 = vpop.permute.xlu0 %2244
          %2248 = vset.pattern.permute.xlu0 0
          %2249 = vperm.xlu0 %2248, %v2195
          %v2250 = vpop.permute.xlu0 %2249
          %v2252 = vmul.f32 %v2204, %v2215
          %v2253 = vmul.f32 %v2205, %v2220
          %v2254 = vmul.f32 %v2206, %v2225
          %v2255 = vmul.f32 %v2207, %v2230
          %v2256 = vmul.f32 %v2208, %v2235
          %v2257 = vmul.f32 %v2209, %v2240
          %v2258 = vmul.f32 %v2210, %v2245
          %v2259 = vmul.f32 %v2211, %v2250
          %v2260 = vpack.c.bf16 %v2253, %v2252
          %v2261 = vpack.c.bf16 %v2255, %v2254
          %v2262 = vpack.c.bf16 %v2257, %v2256
          %v2263 = vpack.c.bf16 %v2259, %v2258
          %2264 = vst.msk [vmem:[#allocation8] sm:$0xff] %vm1298, %v2260
          %2265 = vst.msk [vmem:[#allocation8 + $0x8] sm:$0xff] %vm1298, %v2261
          %2266 = vst.msk [vmem:[#allocation8 + $0x10] sm:$0xff] %vm1298, %v2262
          %2267 = vst.msk [vmem:[#allocation8 + $0x18] sm:$0xff] %vm1298, %v2263
          %s2268 = scalar_lea.vmem [#allocation7], 64
          %v2269 = vld [vmem:[%s2268] sm:$0xff]
          %v2270 = vld [vmem:[%s2268 + $0x8] sm:$0xff]
          %v2271 = vld [vmem:[%s2268 + $0x10] sm:$0xff]
          %v2272 = vld [vmem:[%s2268 + $0x18] sm:$0xff]
          %v2273 = vld [vmem:[%s2268 + $0x20] sm:$0xff]
          %v2274 = vld [vmem:[%s2268 + $0x28] sm:$0xff]
          %v2275 = vld [vmem:[%s2268 + $0x30] sm:$0xff]
          %v2276 = vld [vmem:[%s2268 + $0x38] sm:$0xff]
          %2278 = vset.pattern.permute.xlu0 0
          %2279 = vperm.xlu0 %2278, %v2196
          %v2280 = vpop.permute.xlu0 %2279
          %2283 = vset.pattern.permute.xlu0 0
          %2284 = vperm.xlu0 %2283, %v2197
          %v2285 = vpop.permute.xlu0 %2284
          %2288 = vset.pattern.permute.xlu0 0
          %2289 = vperm.xlu0 %2288, %v2198
          %v2290 = vpop.permute.xlu0 %2289
          %2293 = vset.pattern.permute.xlu0 0
          %2294 = vperm.xlu0 %2293, %v2199
          %v2295 = vpop.permute.xlu0 %2294
          %2298 = vset.pattern.permute.xlu0 0
          %2299 = vperm.xlu0 %2298, %v2200
          %v2300 = vpop.permute.xlu0 %2299
          %2303 = vset.pattern.permute.xlu0 0
          %2304 = vperm.xlu0 %2303, %v2201
          %v2305 = vpop.permute.xlu0 %2304
          %2308 = vset.pattern.permute.xlu0 0
          %2309 = vperm.xlu0 %2308, %v2202
          %v2310 = vpop.permute.xlu0 %2309
          %2313 = vset.pattern.permute.xlu0 0
          %2314 = vperm.xlu0 %2313, %v2203
          %v2315 = vpop.permute.xlu0 %2314
          %v2317 = vmul.f32 %v2269, %v2280
          %v2318 = vmul.f32 %v2270, %v2285
          %v2319 = vmul.f32 %v2271, %v2290
          %v2320 = vmul.f32 %v2272, %v2295
          %v2321 = vmul.f32 %v2273, %v2300
          %v2322 = vmul.f32 %v2274, %v2305
          %v2323 = vmul.f32 %v2275, %v2310
          %v2324 = vmul.f32 %v2276, %v2315
          %v2325 = vpack.c.bf16 %v2318, %v2317
          %v2326 = vpack.c.bf16 %v2320, %v2319
          %v2327 = vpack.c.bf16 %v2322, %v2321
          %v2328 = vpack.c.bf16 %v2324, %v2323
          %2333 = vrot.lane.b32.xlu0 %v2325, 16
          %v2334 = vpop.permute.xlu0 %2333
          %2335 = vrot.lane.b32.xlu0 %v2326, 16
          %v2336 = vpop.permute.xlu0 %2335
          %2337 = vrot.lane.b32.xlu0 %v2327, 16
          %v2338 = vpop.permute.xlu0 %2337
          %2339 = vrot.lane.b32.xlu0 %v2328, 16
          %v2340 = vpop.permute.xlu0 %2339
          %vm2345 = vcmask 261248
          %2346 = vst.msk [vmem:[#allocation8] sm:$0xff] %vm2345, %v2334
          %2347 = vst.msk [vmem:[#allocation8 + $0x8] sm:$0xff] %vm2345, %v2336
          %2348 = vst.msk [vmem:[#allocation8 + $0x10] sm:$0xff] %vm2345, %v2338
          %2349 = vst.msk [vmem:[#allocation8 + $0x18] sm:$0xff] %vm2345, %v2340
          %v2350 = vld [vmem:[%s406] sm:$0xff]
          %v2351 = vld [vmem:[%s406 + $0x8] sm:$0xff]
          %v2352 = vld [vmem:[%s406 + $0x10] sm:$0xff]
          %v2353 = vld [vmem:[%s406 + $0x18] sm:$0xff]
          %v2354 = vld [vmem:[%s406 + $0x20] sm:$0xff]
          %v2355 = vld [vmem:[%s406 + $0x28] sm:$0xff]
          %v2356 = vld [vmem:[%s406 + $0x30] sm:$0xff]
          %v2357 = vld [vmem:[%s406 + $0x38] sm:$0xff]
          %v2358 = vld [vmem:[#allocation8] sm:$0xff]
          %v2359 = vld [vmem:[#allocation8 + $0x8] sm:$0xff]
          %v2360 = vld [vmem:[#allocation8 + $0x10] sm:$0xff]
          %v2361 = vld [vmem:[#allocation8 + $0x18] sm:$0xff]
          %v2362 = vld [vmem:[#allocation21] sm:$0xf]
          %v2363 = vld [vmem:[#allocation21 + $0x4] sm:$0xf]
          %v2364 = vld [vmem:[#allocation21 + $0x8] sm:$0xf]
          %v2365 = vld [vmem:[#allocation21 + $0xc] sm:$0xf]
          %v2366 = vld [vmem:[#allocation21 + $0x10] sm:$0xf]
          %v2367 = vld [vmem:[#allocation21 + $0x14] sm:$0xf]
          %v2368 = vld [vmem:[#allocation21 + $0x18] sm:$0xf]
          %v2369 = vld [vmem:[#allocation21 + $0x1c] sm:$0xf]
          %v2370 = vld [vmem:[#allocation21 + $0x20] sm:$0xf]
          %v2371 = vld [vmem:[#allocation21 + $0x24] sm:$0xf]
          %v2372 = vld [vmem:[#allocation21 + $0x28] sm:$0xf]
          %v2373 = vld [vmem:[#allocation21 + $0x2c] sm:$0xf]
          %v2374 = vld [vmem:[#allocation21 + $0x30] sm:$0xf]
          %v2375 = vld [vmem:[#allocation21 + $0x34] sm:$0xf]
          %v2376 = vld [vmem:[#allocation21 + $0x38] sm:$0xf]
          %v2377 = vld [vmem:[#allocation21 + $0x3c] sm:$0xf]
          %v2378 = vld [vmem:[#allocation23] sm:$0x1]
          %v2380 = vlaneseq
          %v2381 = vshrl.u32 %v2380, 7
          %v2382 = vsub.s32 0, %v2381
          %v2383 = vrot.slane %v2378, %v2382
          %v2401 = vunpack.c.l.b16 %v2362
          %v2402 = vunpack.c.l.b16 %v2363
          %v2403 = vunpack.c.l.b16 %v2364
          %v2404 = vunpack.c.l.b16 %v2365
          %v2405 = vunpack.c.l.b16 %v2366
          %v2406 = vunpack.c.l.b16 %v2367
          %v2407 = vunpack.c.l.b16 %v2368
          %v2408 = vunpack.c.l.b16 %v2369
          %v2409 = vunpack.c.l.b16 %v2370
          %v2410 = vunpack.c.l.b16 %v2371
          %v2411 = vunpack.c.l.b16 %v2372
          %v2412 = vunpack.c.l.b16 %v2373
          %v2413 = vunpack.c.l.b16 %v2374
          %v2414 = vunpack.c.l.b16 %v2375
          %v2415 = vunpack.c.l.b16 %v2376
          %v2416 = vunpack.c.l.b16 %v2377
          %v2417 = vpack.c.b16 %v2402, %v2401
          %v2418 = vpack.c.b16 %v2404, %v2403
          %v2419 = vpack.c.b16 %v2406, %v2405
          %v2420 = vpack.c.b16 %v2408, %v2407
          %v2421 = vpack.c.b16 %v2410, %v2409
          %v2422 = vpack.c.b16 %v2412, %v2411
          %v2423 = vpack.c.b16 %v2414, %v2413
          %v2424 = vpack.c.b16 %v2416, %v2415
          %2433 = vmatprep.subr.bf16.mxu0 0
          %2434 = vmatpush1.bf16.msra.mxu0 %v2417
          %2435 = vmatprep.subr.bf16.mxu0 0
          %2436 = vmatpush1.bf16.msra.mxu0 %v2418
          %2437 = vmatprep.subr.bf16.mxu0 0
          %2438 = vmatpush1.bf16.msra.mxu0 %v2419
          %2439 = vmatprep.subr.bf16.mxu0 0
          %2440 = vmatpush1.bf16.msra.mxu0 %v2420
          %2441 = vmatprep.subr.bf16.mxu0 0
          %2442 = vmatpush1.bf16.msra.mxu0 %v2421
          %2443 = vmatprep.subr.bf16.mxu0 0
          %2444 = vmatpush1.bf16.msra.mxu0 %v2422
          %2445 = vmatprep.subr.bf16.mxu0 0
          %2446 = vmatpush1.bf16.msra.mxu0 %v2423
          %2447 = vmatprep.subr.bf16.mxu0 0
          %2448 = vmatpush1.bf16.msra.mxu0 %v2424
          %2449 = vmatprep.subr.bf16.mxu0 0
          %2450 = vmatpush1.bf16.msra.mxu0 0
          %2451 = vmatprep.subr.bf16.mxu0 0
          %2452 = vmatpush1.bf16.msra.mxu0 0
          %2453 = vmatprep.subr.bf16.mxu0 0
          %2454 = vmatpush1.bf16.msra.mxu0 0
          %2455 = vmatprep.subr.bf16.mxu0 0
          %2456 = vmatpush1.bf16.msra.mxu0 0
          %2457 = vmatprep.subr.bf16.mxu0 0
          %2458 = vmatpush1.bf16.msra.mxu0 0
          %2459 = vmatprep.subr.bf16.mxu0 0
          %2460 = vmatpush1.bf16.msra.mxu0 0
          %2461 = vmatprep.subr.bf16.mxu0 0
          %2462 = vmatpush1.bf16.msra.mxu0 0
          %2463 = vmatprep.subr.bf16.mxu0 0
          %2464 = vmatpush1.bf16.msra.mxu0 0
          %2465 = vmatprep.mubr.bf16.mxu0 0
          %2466 = vmatmul.mubr.bf16.gmra.mrb[0].mxu0 %v2358
          %v2467 = vpop.f32.mrb[0].mxu0
          %v2468 = vadd.f32 %v2383, %v2467
          %v2469 = vpop.f32.mrb[0].mxu0
          %v2470 = vpop.f32.mrb[0].mxu0
          %v2471 = vadd.f32 %v2383, %v2470
          %v2472 = vpop.f32.mrb[0].mxu0
          %2473 = vmatprep.mubr.bf16.mxu0 0
          %2474 = vmatmul.mubr.bf16.gmra.mrb[0].mxu0 %v2359
          %v2475 = vpop.f32.mrb[0].mxu0
          %v2476 = vadd.f32 %v2383, %v2475
          %v2477 = vpop.f32.mrb[0].mxu0
          %v2478 = vpop.f32.mrb[0].mxu0
          %v2479 = vadd.f32 %v2383, %v2478
          %v2480 = vpop.f32.mrb[0].mxu0
          %2481 = vmatprep.mubr.bf16.mxu0 0
          %2482 = vmatmul.mubr.bf16.gmra.mrb[0].mxu0 %v2360
          %v2483 = vpop.f32.mrb[0].mxu0
          %v2484 = vadd.f32 %v2383, %v2483
          %v2485 = vpop.f32.mrb[0].mxu0
          %v2486 = vpop.f32.mrb[0].mxu0
          %v2487 = vadd.f32 %v2383, %v2486
          %v2488 = vpop.f32.mrb[0].mxu0
          %2489 = vmatprep.mubr.bf16.mxu0 0
          %2490 = vmatmul.mubr.bf16.gmra.mrb[0].mxu0 %v2361
          %v2491 = vpop.f32.mrb[0].mxu0
          %v2492 = vadd.f32 %v2383, %v2491
          %v2493 = vpop.f32.mrb[0].mxu0
          %v2494 = vpop.f32.mrb[0].mxu0
          %v2495 = vadd.f32 %v2383, %v2494
          %v2496 = vpop.f32.mrb[0].mxu0
          %2497 = vdwg.mxu0
          %v2498 = vadd.f32 %v2468, %v2350
          %v2499 = vadd.f32 %v2471, %v2351
          %v2500 = vadd.f32 %v2476, %v2352
          %v2501 = vadd.f32 %v2479, %v2353
          %v2502 = vadd.f32 %v2484, %v2354
          %v2503 = vadd.f32 %v2487, %v2355
          %v2504 = vadd.f32 %v2492, %v2356
          %v2505 = vadd.f32 %v2495, %v2357
          %2506 = vst [vmem:[%s472] sm:$0xff] %v2498
          %2507 = vst [vmem:[%s472 + $0x8] sm:$0xff] %v2499
          %2508 = vst [vmem:[%s472 + $0x10] sm:$0xff] %v2500
          %2509 = vst [vmem:[%s472 + $0x18] sm:$0xff] %v2501
          %2510 = vst [vmem:[%s472 + $0x20] sm:$0xff] %v2502
          %2511 = vst [vmem:[%s472 + $0x28] sm:$0xff] %v2503
          %2512 = vst [vmem:[%s472 + $0x30] sm:$0xff] %v2504
          %2513 = vst [vmem:[%s472 + $0x38] sm:$0xff] %v2505
        $region100: #{tpu_custom_call.1} parent=55 // pred_fallthru
          _
        %s2514 = sand.u32 %s244, 1
        %s2515 = scalar_lea.sflag [#allocation11], %s2514
        %s2516 = sand.u32 %s244, 1
        %s2517 = smul.addr %s2516, 64
        %s2518 = scalar_lea.vmem [#allocation24], %s2517
        // Predicated region
        $region101: #{tpu_custom_call.1} parent=55 // pred_check
          %p2519 = pneg %p254
        $region102: #{tpu_custom_call.1} parent=55 // pred_check_branch
          %2521 = sbr.rel (%p2519) target = $region104
        $region103: #{tpu_custom_call.1} parent=55 // pred_region
          %s2523 = ssub.s32 1024, 1024
          %2524 = vsyncadd %s2515, %s2523
          %s2525 = smul.addr %s34, 8
          %s2526 = smul.addr %s2525, 128
          %s2527 = scalar_lea.hbm %s9, %s2526
          %s2528 = sshll.u32 %s2518, 4
          %s2529 = int_to_ptr.vmem [resolvable:$true] %s2528
          %2534 = dma.vmem_to_hbm [thread:$0]  %s2529, 1024, %s2527, %s2515, 128, 128, 8
        $region104: #{tpu_custom_call.1} parent=55 // pred_fallthru
          _
      $region56: #{tpu_custom_call.1} parent=5 // pred_fallthru
        _
      %p2535 = scmp.le.s32.totalorder 2, %s25
      // Predicated region
      $region105: #{tpu_custom_call.1} parent=5 // pred_check
        %p2536 = pneg %p2535
      $region106: #{tpu_custom_call.1} parent=5 // pred_check_branch
        %2538 = sbr.rel (%p2536) target = $region108
      $region107: #{tpu_custom_call.1} parent=5 // pred_region
        %s2539 = ssub.s32 %s25, 2
        // Predicated region
        $region109: #{tpu_custom_call.1} parent=107 // pred_check
          %p2540 = pneg %p260
        $region110: #{tpu_custom_call.1} parent=107 // pred_check_branch
          %2542 = sbr.rel (%p2540) target = $region112
        $region111: #{tpu_custom_call.1} parent=107 // pred_region
          %s2543 = sand.u32 %s245, 1
          %s2544 = scalar_lea.sflag [#allocation11], %s2543
          %s2545 = sand.u32 %s245, 1
          %s2546 = smul.addr %s2545, 64
          %s2547 = scalar_lea.vmem [#allocation24], %s2546
          %2548 = dma.done %s2544, 1024
        $region112: #{tpu_custom_call.1} parent=107 // pred_fallthru
          _
      $region108: #{tpu_custom_call.1} parent=5 // pred_fallthru
        _
    $region6: #{tpu_custom_call.1} parent=1 // loop_footer
      %s29 = sadd.s32 1, %s25
    $region7: #{tpu_custom_call.1} parent=1 // loop_footer_branch
      %24 = sbr.rel target = $region3
    $region8: #{tpu_custom_call.1} parent=1 // loop_exit
      _
    %2549 = vsyncpa [#allocation10], 1
    %s2550 = scalar_lea.sflag [#allocation10], 1
    %2551 = vsyncpa %s2550, 1
    %2552 = vsyncpa [#allocation13], 1
    %2553 = vsyncpa [#allocation16], 1
    %2554 = vsyncpa [#allocation19], 1
    %2555 = vsyncpa [#allocation22], 1
    %2556 = vsyncpa [#allocation11], 1
    %s2557 = scalar_lea.sflag [#allocation11], 1
    %2558 = vsyncpa %s2557, 1

</llo_original>
